<compile_context>
chip_gen: v5e
topology: v5e:2x2
jax: 0.10.0
libtpu: 0.0.40
codegen_flags: <defaults>
</compile_context>

<pallas_src>
import math
import functools

import jax
import jax.numpy as jnp
from jax.experimental import pallas as pl
from jax.experimental.pallas import tpu as pltpu  # noqa: F401  (TPU backend assumed)

# ---- module-consistent config ----
VOCAB = 50
VOCAB_PAD = 64          # padded vocab rows (zeros) for aligned one-hot matmul
EMB = 32
HEADS = 4
HEAD_DIM = EMB // HEADS
N_LAYERS = 2
FWD = 64
MAX_LEN = 16
N_CLASSES = 2
BATCH = 2
SEQ = 8
SCALE = 1.0 / math.sqrt(EMB)   # torch: softmax(key_out / emb_dim**0.5)


# ---------------------------------------------------------------------------
# Fused Pallas kernel: embedding + 2 transformer blocks + token-0 + classifier
# ---------------------------------------------------------------------------
def encoder_kernel(tok_ref, pos_ref, bias_ref, emb_ref,
                   wqkv_ref, bqkv_ref, wfc_ref, bfc_ref,
                   g1_ref, be1_ref, w1_ref, b1_ref, w2_ref, b2_ref,
                   g2_ref, be2_ref, wout_ref, bout_ref, out_ref,
                   *, batch, seq):
    f32 = jnp.float32
    bs = batch * seq

    def layernorm(z, g, b):                      # PyTorch LayerNorm: biased var, eps=1e-6
        mu = jnp.mean(z, axis=-1, keepdims=True)
        var = jnp.mean((z - mu) ** 2, axis=-1, keepdims=True)
        return (z - mu) * jax.lax.rsqrt(var + 1e-6) * g + b

    # Embedding lookup as one-hot matmul (exact) + positional embedding.
    tok = tok_ref[...]                                               # (B*S, 1) int32
    onehot = (tok == jax.lax.broadcasted_iota(jnp.int32, (bs, VOCAB_PAD), 1)).astype(f32)
    x = jnp.dot(onehot, emb_ref[...], preferred_element_type=f32) + pos_ref[...]  # (B*S, E)

    bias = bias_ref[...]                                             # (B, 1, S) additive mask

    for l in range(N_LAYERS):                                        # static unroll (2 layers)
        # Fused Q/K/V projection for all heads: one matmul against block-diagonal weights.
        qkv = jnp.dot(x, wqkv_ref[l], preferred_element_type=f32) + bqkv_ref[l]   # (B*S, 3E)
        qkv3 = qkv.reshape(batch, seq, 3 * EMB)

        heads = []
        for h in range(HEADS):                                       # static unroll (4 heads)
            lo = h * HEAD_DIM
            qh = qkv3[:, :, lo:lo + HEAD_DIM]                        # (B, S, hd)
            kh = qkv3[:, :, EMB + lo:EMB + lo + HEAD_DIM]
            vh = qkv3[:, :, 2 * EMB + lo:2 * EMB + lo + HEAD_DIM]
            s = jnp.einsum('bqd,bkd->bqk', qh, kh, preferred_element_type=f32)
            a = jax.nn.softmax((s + bias) * SCALE, axis=-1)          # mask + scale + softmax
            heads.append(jnp.einsum('bqk,bkd->bqd', a, vh, preferred_element_type=f32))

        att = jnp.concatenate(heads, axis=-1).reshape(bs, EMB)       # (B*S, E)
        att = jnp.dot(att, wfc_ref[l], preferred_element_type=f32) + bfc_ref[l]

        x1 = layernorm(att + x, g1_ref[l], be1_ref[l])               # norm1(attn + query)
        h1 = jnp.maximum(
            jnp.dot(x1, w1_ref[l], preferred_element_type=f32) + b1_ref[l], 0.0)
        ffn = jnp.dot(h1, w2_ref[l], preferred_element_type=f32) + b2_ref[l]
        x = layernorm(ffn + x1, g2_ref[l], be2_ref[l])               # norm2(ffn + x)

    # kind=None -> take token 0, then classifier.
    cls = x.reshape(batch, seq, EMB)[:, 0, :]                        # (B, E)
    out_ref[...] = (jnp.dot(cls, wout_ref[...], preferred_element_type=f32)
                    + bout_ref[...]).astype(out_ref.dtype)


# ---------------------------------------------------------------------------
# Wrapper: precompute mask bias / positions, single pallas_call (no grid)
# ---------------------------------------------------------------------------
@jax.jit
def encoder_forward(x_tokens, mask, params):
    (emb_pad, pos_table, wqkv, bqkv, wfc, bfc,
     g1, be1, w1, b1, w2, b2, g2, be2, wout_t, bout) = params
    B, S = x_tokens.shape

    tok = x_tokens.reshape(B * S, 1).astype(jnp.int32)
    pos = jnp.tile(pos_table[:S], (B, 1))                            # (B*S, E)
    # mask == 0  ->  key is masked (same semantics as masked_fill(mask==0, -1e20))
    bias = jnp.where(mask == 0, jnp.float32(-1e20), jnp.float32(0.0))[:, None, :]

    kernel = functools.partial(encoder_kernel, batch=B, seq=S)
    return pl.pallas_call(
        kernel,
        out_shape=jax.ShapeDtypeStruct((B, N_CLASSES), jnp.float32),
    )(tok, pos, bias, emb_pad, wqkv, bqkv, wfc, bfc,
      g1, be1, w1, b1, w2, b2, g2, be2, wout_t, bout)


# ---------------------------------------------------------------------------
# Parameter init (deterministic, synthetic): spectral-norm, transpose, fuse QKV
# ---------------------------------------------------------------------------
def spectral_normalize(w):
    sigma = jnp.linalg.svd(w, compute_uv=False)[0]
    return w / sigma


def _linear(key, out_dim, in_dim):
    kw, kb = jax.random.split(key)
    bound = 1.0 / math.sqrt(in_dim)
    w = jax.random.uniform(kw, (out_dim, in_dim), jnp.float32, -bound, bound)
    b = jax.random.uniform(kb, (out_dim,), jnp.float32, -bound, bound)
    return w, b


def init_encoder_params(key):
    keys = iter(jax.random.split(key, 3 + 6 * N_LAYERS))
    emb_table = jax.random.normal(next(keys), (VOCAB, EMB), jnp.float32)
    emb_pad = jnp.zeros((VOCAB_PAD, EMB), jnp.float32).at[:VOCAB].set(emb_table)
    pos_table = jax.random.normal(next(keys), (MAX_LEN, EMB), jnp.float32)

    eye_h = jnp.eye(HEADS, dtype=jnp.float32)
    names = ('wqkv', 'bqkv', 'wfc', 'bfc', 'g1', 'be1',
             'w1', 'b1', 'w2', 'b2', 'g2', 'be2')
    stacks = {n: [] for n in names}

    for _ in range(N_LAYERS):
        wq, bq = _linear(next(keys), HEAD_DIM, HEAD_DIM)
        wk, bk = _linear(next(keys), HEAD_DIM, HEAD_DIM)
        wv, bv = _linear(next(keys), HEAD_DIM, HEAD_DIM)
        wfc, bfc = _linear(next(keys), EMB, EMB)
        w1, b1 = _linear(next(keys), FWD, EMB)
        w2, b2 = _linear(next(keys), EMB, FWD)

        # spectral_norm (exact sigma_max), pre-transpose to (in, out), and fuse the
        # per-head Q/K/V projections into one block-diagonal (E, 3E) weight.
        wq_bd = jnp.kron(eye_h, spectral_normalize(wq).T)            # (E, E)
        wk_bd = jnp.kron(eye_h, spectral_normalize(wk).T)
        wv_bd = jnp.kron(eye_h, spectral_normalize(wv).T)
        stacks['wqkv'].append(jnp.concatenate([wq_bd, wk_bd, wv_bd], axis=1))
        stacks['bqkv'].append(jnp.concatenate(
            [jnp.tile(bq, HEADS), jnp.tile(bk, HEADS), jnp.tile(bv, HEADS)])[None, :])
        stacks['wfc'].append(spectral_normalize(wfc).T)              # (E, E)
        stacks['bfc'].append(bfc[None, :])
        stacks['g1'].append(jnp.ones((1, EMB), jnp.float32))
        stacks['be1'].append(jnp.zeros((1, EMB), jnp.float32))
        stacks['w1'].append(spectral_normalize(w1).T)                # (E, FWD)
        stacks['b1'].append(b1[None, :])
        stacks['w2'].append(spectral_normalize(w2).T)                # (FWD, E)
        stacks['b2'].append(b2[None, :])
        stacks['g2'].append(jnp.ones((1, EMB), jnp.float32))
        stacks['be2'].append(jnp.zeros((1, EMB), jnp.float32))

    wout, bout = _linear(next(keys), N_CLASSES, EMB)                 # fc_out: not spectral
    packed = tuple(jnp.stack(stacks[n]) for n in names)              # leading layer dim
    return (emb_pad, pos_table) + packed + (wout.T, bout[None, :])


# ---------------------------------------------------------------------------
if __name__ == "__main__":
    key = jax.random.PRNGKey(0)
    kp, kx = jax.random.split(key)
    params = init_encoder_params(kp)

    x = jax.random.randint(kx, (BATCH, SEQ), 0, VOCAB, dtype=jnp.int32)
    # mask: 1 = attend, 0 = masked key (broadcast over heads/queries, like (N,1,1,K))
    mask = jnp.ones((BATCH, SEQ), dtype=jnp.int32)
    mask = mask.at[1, -2:].set(0)

    logits = encoder_forward(x, mask, params)
    jax.block_until_ready(logits)
    assert logits.shape == (BATCH, N_CLASSES)
    assert bool(jnp.all(jnp.isfinite(logits)))
    print("KERNEL_OK")
</pallas_src>

<mosaic_0001>
module attributes {stable_mosaic.version = 11 : i64} {
  func.func @encoder_kernel(%arg0: memref<16x1xi32, #tpu.memory_space<vmem>>, %arg1: memref<16x32xf32, #tpu.memory_space<vmem>>, %arg2: memref<2x1x8xf32, #tpu.memory_space<vmem>>, %arg3: memref<64x32xf32, #tpu.memory_space<vmem>>, %arg4: memref<2x32x96xf32, #tpu.memory_space<vmem>>, %arg5: memref<2x1x96xf32, #tpu.memory_space<vmem>>, %arg6: memref<2x32x32xf32, #tpu.memory_space<vmem>>, %arg7: memref<2x1x32xf32, #tpu.memory_space<vmem>>, %arg8: memref<2x1x32xf32, #tpu.memory_space<vmem>>, %arg9: memref<2x1x32xf32, #tpu.memory_space<vmem>>, %arg10: memref<2x32x64xf32, #tpu.memory_space<vmem>>, %arg11: memref<2x1x64xf32, #tpu.memory_space<vmem>>, %arg12: memref<2x64x32xf32, #tpu.memory_space<vmem>>, %arg13: memref<2x1x32xf32, #tpu.memory_space<vmem>>, %arg14: memref<2x1x32xf32, #tpu.memory_space<vmem>>, %arg15: memref<2x1x32xf32, #tpu.memory_space<vmem>>, %arg16: memref<32x2xf32, #tpu.memory_space<vmem>>, %arg17: memref<1x2xf32, #tpu.memory_space<vmem>>, %arg18: memref<2x2xf32, #tpu.memory_space<vmem>>) attributes {dimension_semantics = [], scalar_prefetch = 0 : i64, scratch_operands = 0 : i64, tpu.core_type = #tpu.core_type<tc>} {
    %c0 = arith.constant 0 : index
    %c0_0 = arith.constant 0 : index
    %0 = vector.load %arg0[%c0, %c0_0] : memref<16x1xi32, #tpu.memory_space<vmem>>, vector<16x1xi32>
    %1 = tpu.iota {dimensions = array<i32: 1>} : vector<16x64xi32>
    %2 = vector.broadcast %0 : vector<16x1xi32> to vector<16x64xi32>
    %3 = arith.cmpi eq, %2, %1 : vector<16x64xi32>
    %4 = arith.extui %3 : vector<16x64xi1> to vector<16x64xi32>
    %5 = arith.sitofp %4 : vector<16x64xi32> to vector<16x64xf32>
    %c0_1 = arith.constant 0 : index
    %c0_2 = arith.constant 0 : index
    %6 = vector.load %arg3[%c0_1, %c0_2] : memref<64x32xf32, #tpu.memory_space<vmem>>, vector<64x32xf32>
    %cst = arith.constant dense<0.000000e+00> : vector<16x32xf32>
    %7 = tpu.matmul %5, %6, %cst {dimension_numbers = #tpu.dot_dimension_numbers<[1], [0], [0], [1], [0, 0, 1, 1], [], []>} : vector<16x64xf32>, vector<64x32xf32>, vector<16x32xf32> -> vector<16x32xf32>
    %c0_3 = arith.constant 0 : index
    %c0_4 = arith.constant 0 : index
    %8 = vector.load %arg1[%c0_3, %c0_4] : memref<16x32xf32, #tpu.memory_space<vmem>>, vector<16x32xf32>
    %9 = arith.addf %7, %8 : vector<16x32xf32>
    %c0_5 = arith.constant 0 : index
    %c0_6 = arith.constant 0 : index
    %c0_7 = arith.constant 0 : index
    %10 = vector.load %arg2[%c0_5, %c0_6, %c0_7] : memref<2x1x8xf32, #tpu.memory_space<vmem>>, vector<2x1x8xf32>
    %c0_8 = arith.constant 0 : index
    %c0_9 = arith.constant 0 : index
    %c0_10 = arith.constant 0 : index
    %11 = vector.load %arg4[%c0_8, %c0_9, %c0_10] : memref<2x32x96xf32, #tpu.memory_space<vmem>>, vector<1x32x96xf32>
    %12 = vector.shape_cast %11 : vector<1x32x96xf32> to vector<32x96xf32>
    %cst_11 = arith.constant dense<0.000000e+00> : vector<16x96xf32>
    %13 = tpu.matmul %9, %12, %cst_11 {dimension_numbers = #tpu.dot_dimension_numbers<[1], [0], [0], [1], [0, 0, 1, 1], [], []>} : vector<16x32xf32>, vector<32x96xf32>, vector<16x96xf32> -> vector<16x96xf32>
    %c0_12 = arith.constant 0 : index
    %c0_13 = arith.constant 0 : index
    %c0_14 = arith.constant 0 : index
    %14 = vector.load %arg5[%c0_12, %c0_13, %c0_14] : memref<2x1x96xf32, #tpu.memory_space<vmem>>, vector<1x1x96xf32>
    %15 = vector.shape_cast %14 : vector<1x1x96xf32> to vector<1x96xf32>
    %16 = vector.broadcast %15 : vector<1x96xf32> to vector<16x96xf32>
    %17 = arith.addf %13, %16 : vector<16x96xf32>
    %18 = vector.shape_cast %17 : vector<16x96xf32> to vector<2x8x96xf32>
    %19 = vector.extract_strided_slice %18 {offsets = [0, 0, 0], sizes = [2, 8, 8], strides = [1, 1, 1]} : vector<2x8x96xf32> to vector<2x8x8xf32>
    %20 = vector.extract_strided_slice %18 {offsets = [0, 0, 32], sizes = [2, 8, 8], strides = [1, 1, 1]} : vector<2x8x96xf32> to vector<2x8x8xf32>
    %21 = vector.extract_strided_slice %18 {offsets = [0, 0, 64], sizes = [2, 8, 8], strides = [1, 1, 1]} : vector<2x8x96xf32> to vector<2x8x8xf32>
    "tpu.trace_start"() <{level = 10 : i32, message = "bqd,bkd->bqk"}> : () -> ()
    %cst_15 = arith.constant dense<0.000000e+00> : vector<2x8x8xf32>
    %22 = tpu.matmul %19, %20, %cst_15 {dimension_numbers = #tpu.dot_dimension_numbers<[2], [2], [1], [1], [0, 0, 0, 1, 1, 1], [0], [0]>} : vector<2x8x8xf32>, vector<2x8x8xf32>, vector<2x8x8xf32> -> vector<2x8x8xf32>
    "tpu.trace_stop"() : () -> ()
    %23 = vector.broadcast %10 : vector<2x1x8xf32> to vector<2x8x8xf32>
    %24 = arith.addf %22, %23 : vector<2x8x8xf32>
    %cst_16 = arith.constant 0.176776692 : f32
    %25 = vector.broadcast %cst_16 : f32 to vector<2x8x8xf32>
    %26 = arith.mulf %24, %25 : vector<2x8x8xf32>
    %cst_17 = arith.constant dense<0xFF800000> : vector<2x8xf32>
    %27 = vector.multi_reduction <maximumf>, %26, %cst_17 [2] : vector<2x8x8xf32> to vector<2x8xf32>
    %cst_18 = arith.constant 0xFF800000 : f32
    %28 = vector.broadcast %cst_18 : f32 to vector<2x8xf32>
    %29 = arith.maximumf %28, %27 : vector<2x8xf32>
    %30 = vector.shape_cast %29 : vector<2x8xf32> to vector<2x8x1xf32>
    %31 = vector.broadcast %30 : vector<2x8x1xf32> to vector<2x8x8xf32>
    %32 = arith.subf %26, %31 : vector<2x8x8xf32>
    %33 = math.exp %32 : vector<2x8x8xf32>
    %cst_19 = arith.constant dense<0.000000e+00> : vector<2x8xf32>
    %34 = vector.multi_reduction <add>, %33, %cst_19 [2] : vector<2x8x8xf32> to vector<2x8xf32>
    %35 = vector.shape_cast %34 : vector<2x8xf32> to vector<2x8x1xf32>
    %36 = vector.broadcast %35 : vector<2x8x1xf32> to vector<2x8x8xf32>
    %37 = arith.divf %33, %36 : vector<2x8x8xf32>
    "tpu.trace_start"() <{level = 10 : i32, message = "bqk,bkd->bqd"}> : () -> ()
    %cst_20 = arith.constant dense<0.000000e+00> : vector<2x8x8xf32>
    %38 = tpu.matmul %37, %21, %cst_20 {dimension_numbers = #tpu.dot_dimension_numbers<[2], [1], [1], [2], [0, 0, 0, 1, 1, 2], [0], [0]>} : vector<2x8x8xf32>, vector<2x8x8xf32>, vector<2x8x8xf32> -> vector<2x8x8xf32>
    "tpu.trace_stop"() : () -> ()
    %39 = vector.extract_strided_slice %18 {offsets = [0, 0, 8], sizes = [2, 8, 8], strides = [1, 1, 1]} : vector<2x8x96xf32> to vector<2x8x8xf32>
    %40 = vector.extract_strided_slice %18 {offsets = [0, 0, 40], sizes = [2, 8, 8], strides = [1, 1, 1]} : vector<2x8x96xf32> to vector<2x8x8xf32>
    %41 = vector.extract_strided_slice %18 {offsets = [0, 0, 72], sizes = [2, 8, 8], strides = [1, 1, 1]} : vector<2x8x96xf32> to vector<2x8x8xf32>
    "tpu.trace_start"() <{level = 10 : i32, message = "bqd,bkd->bqk"}> : () -> ()
    %cst_21 = arith.constant dense<0.000000e+00> : vector<2x8x8xf32>
    %42 = tpu.matmul %39, %40, %cst_21 {dimension_numbers = #tpu.dot_dimension_numbers<[2], [2], [1], [1], [0, 0, 0, 1, 1, 1], [0], [0]>} : vector<2x8x8xf32>, vector<2x8x8xf32>, vector<2x8x8xf32> -> vector<2x8x8xf32>
    "tpu.trace_stop"() : () -> ()
    %43 = vector.broadcast %10 : vector<2x1x8xf32> to vector<2x8x8xf32>
    %44 = arith.addf %42, %43 : vector<2x8x8xf32>
    %cst_22 = arith.constant 0.176776692 : f32
    %45 = vector.broadcast %cst_22 : f32 to vector<2x8x8xf32>
    %46 = arith.mulf %44, %45 : vector<2x8x8xf32>
    %cst_23 = arith.constant dense<0xFF800000> : vector<2x8xf32>
    %47 = vector.multi_reduction <maximumf>, %46, %cst_23 [2] : vector<2x8x8xf32> to vector<2x8xf32>
    %cst_24 = arith.constant 0xFF800000 : f32
    %48 = vector.broadcast %cst_24 : f32 to vector<2x8xf32>
    %49 = arith.maximumf %48, %47 : vector<2x8xf32>
    %50 = vector.shape_cast %49 : vector<2x8xf32> to vector<2x8x1xf32>
    %51 = vector.broadcast %50 : vector<2x8x1xf32> to vector<2x8x8xf32>
    %52 = arith.subf %46, %51 : vector<2x8x8xf32>
    %53 = math.exp %52 : vector<2x8x8xf32>
    %cst_25 = arith.constant dense<0.000000e+00> : vector<2x8xf32>
    %54 = vector.multi_reduction <add>, %53, %cst_25 [2] : vector<2x8x8xf32> to vector<2x8xf32>
    %55 = vector.shape_cast %54 : vector<2x8xf32> to vector<2x8x1xf32>
    %56 = vector.broadcast %55 : vector<2x8x1xf32> to vector<2x8x8xf32>
    %57 = arith.divf %53, %56 : vector<2x8x8xf32>
    "tpu.trace_start"() <{level = 10 : i32, message = "bqk,bkd->bqd"}> : () -> ()
    %cst_26 = arith.constant dense<0.000000e+00> : vector<2x8x8xf32>
    %58 = tpu.matmul %57, %41, %cst_26 {dimension_numbers = #tpu.dot_dimension_numbers<[2], [1], [1], [2], [0, 0, 0, 1, 1, 2], [0], [0]>} : vector<2x8x8xf32>, vector<2x8x8xf32>, vector<2x8x8xf32> -> vector<2x8x8xf32>
    "tpu.trace_stop"() : () -> ()
    %59 = vector.extract_strided_slice %18 {offsets = [0, 0, 16], sizes = [2, 8, 8], strides = [1, 1, 1]} : vector<2x8x96xf32> to vector<2x8x8xf32>
    %60 = vector.extract_strided_slice %18 {offsets = [0, 0, 48], sizes = [2, 8, 8], strides = [1, 1, 1]} : vector<2x8x96xf32> to vector<2x8x8xf32>
    %61 = vector.extract_strided_slice %18 {offsets = [0, 0, 80], sizes = [2, 8, 8], strides = [1, 1, 1]} : vector<2x8x96xf32> to vector<2x8x8xf32>
    "tpu.trace_start"() <{level = 10 : i32, message = "bqd,bkd->bqk"}> : () -> ()
    %cst_27 = arith.constant dense<0.000000e+00> : vector<2x8x8xf32>
    %62 = tpu.matmul %59, %60, %cst_27 {dimension_numbers = #tpu.dot_dimension_numbers<[2], [2], [1], [1], [0, 0, 0, 1, 1, 1], [0], [0]>} : vector<2x8x8xf32>, vector<2x8x8xf32>, vector<2x8x8xf32> -> vector<2x8x8xf32>
    "tpu.trace_stop"() : () -> ()
    %63 = vector.broadcast %10 : vector<2x1x8xf32> to vector<2x8x8xf32>
    %64 = arith.addf %62, %63 : vector<2x8x8xf32>
    %cst_28 = arith.constant 0.176776692 : f32
    %65 = vector.broadcast %cst_28 : f32 to vector<2x8x8xf32>
    %66 = arith.mulf %64, %65 : vector<2x8x8xf32>
    %cst_29 = arith.constant dense<0xFF800000> : vector<2x8xf32>
    %67 = vector.multi_reduction <maximumf>, %66, %cst_29 [2] : vector<2x8x8xf32> to vector<2x8xf32>
    %cst_30 = arith.constant 0xFF800000 : f32
    %68 = vector.broadcast %cst_30 : f32 to vector<2x8xf32>
    %69 = arith.maximumf %68, %67 : vector<2x8xf32>
    %70 = vector.shape_cast %69 : vector<2x8xf32> to vector<2x8x1xf32>
    %71 = vector.broadcast %70 : vector<2x8x1xf32> to vector<2x8x8xf32>
    %72 = arith.subf %66, %71 : vector<2x8x8xf32>
    %73 = math.exp %72 : vector<2x8x8xf32>
    %cst_31 = arith.constant dense<0.000000e+00> : vector<2x8xf32>
    %74 = vector.multi_reduction <add>, %73, %cst_31 [2] : vector<2x8x8xf32> to vector<2x8xf32>
    %75 = vector.shape_cast %74 : vector<2x8xf32> to vector<2x8x1xf32>
    %76 = vector.broadcast %75 : vector<2x8x1xf32> to vector<2x8x8xf32>
    %77 = arith.divf %73, %76 : vector<2x8x8xf32>
    "tpu.trace_start"() <{level = 10 : i32, message = "bqk,bkd->bqd"}> : () -> ()
    %cst_32 = arith.constant dense<0.000000e+00> : vector<2x8x8xf32>
    %78 = tpu.matmul %77, %61, %cst_32 {dimension_numbers = #tpu.dot_dimension_numbers<[2], [1], [1], [2], [0, 0, 0, 1, 1, 2], [0], [0]>} : vector<2x8x8xf32>, vector<2x8x8xf32>, vector<2x8x8xf32> -> vector<2x8x8xf32>
    "tpu.trace_stop"() : () -> ()
    %79 = vector.extract_strided_slice %18 {offsets = [0, 0, 24], sizes = [2, 8, 8], strides = [1, 1, 1]} : vector<2x8x96xf32> to vector<2x8x8xf32>
    %80 = vector.extract_strided_slice %18 {offsets = [0, 0, 56], sizes = [2, 8, 8], strides = [1, 1, 1]} : vector<2x8x96xf32> to vector<2x8x8xf32>
    %81 = vector.extract_strided_slice %18 {offsets = [0, 0, 88], sizes = [2, 8, 8], strides = [1, 1, 1]} : vector<2x8x96xf32> to vector<2x8x8xf32>
    "tpu.trace_start"() <{level = 10 : i32, message = "bqd,bkd->bqk"}> : () -> ()
    %cst_33 = arith.constant dense<0.000000e+00> : vector<2x8x8xf32>
    %82 = tpu.matmul %79, %80, %cst_33 {dimension_numbers = #tpu.dot_dimension_numbers<[2], [2], [1], [1], [0, 0, 0, 1, 1, 1], [0], [0]>} : vector<2x8x8xf32>, vector<2x8x8xf32>, vector<2x8x8xf32> -> vector<2x8x8xf32>
    "tpu.trace_stop"() : () -> ()
    %83 = vector.broadcast %10 : vector<2x1x8xf32> to vector<2x8x8xf32>
    %84 = arith.addf %82, %83 : vector<2x8x8xf32>
    %cst_34 = arith.constant 0.176776692 : f32
    %85 = vector.broadcast %cst_34 : f32 to vector<2x8x8xf32>
    %86 = arith.mulf %84, %85 : vector<2x8x8xf32>
    %cst_35 = arith.constant dense<0xFF800000> : vector<2x8xf32>
    %87 = vector.multi_reduction <maximumf>, %86, %cst_35 [2] : vector<2x8x8xf32> to vector<2x8xf32>
    %cst_36 = arith.constant 0xFF800000 : f32
    %88 = vector.broadcast %cst_36 : f32 to vector<2x8xf32>
    %89 = arith.maximumf %88, %87 : vector<2x8xf32>
    %90 = vector.shape_cast %89 : vector<2x8xf32> to vector<2x8x1xf32>
    %91 = vector.broadcast %90 : vector<2x8x1xf32> to vector<2x8x8xf32>
    %92 = arith.subf %86, %91 : vector<2x8x8xf32>
    %93 = math.exp %92 : vector<2x8x8xf32>
    %cst_37 = arith.constant dense<0.000000e+00> : vector<2x8xf32>
    %94 = vector.multi_reduction <add>, %93, %cst_37 [2] : vector<2x8x8xf32> to vector<2x8xf32>
    %95 = vector.shape_cast %94 : vector<2x8xf32> to vector<2x8x1xf32>
    %96 = vector.broadcast %95 : vector<2x8x1xf32> to vector<2x8x8xf32>
    %97 = arith.divf %93, %96 : vector<2x8x8xf32>
    "tpu.trace_start"() <{level = 10 : i32, message = "bqk,bkd->bqd"}> : () -> ()
    %cst_38 = arith.constant dense<0.000000e+00> : vector<2x8x8xf32>
    %98 = tpu.matmul %97, %81, %cst_38 {dimension_numbers = #tpu.dot_dimension_numbers<[2], [1], [1], [2], [0, 0, 0, 1, 1, 2], [0], [0]>} : vector<2x8x8xf32>, vector<2x8x8xf32>, vector<2x8x8xf32> -> vector<2x8x8xf32>
    "tpu.trace_stop"() : () -> ()
    %99 = tpu.concatenate %38, %58, %78, %98 in 2 : vector<2x8x8xf32>, vector<2x8x8xf32>, vector<2x8x8xf32>, vector<2x8x8xf32> -> vector<2x8x32xf32>
    %100 = vector.shape_cast %99 : vector<2x8x32xf32> to vector<16x32xf32>
    %c0_39 = arith.constant 0 : index
    %c0_40 = arith.constant 0 : index
    %c0_41 = arith.constant 0 : index
    %101 = vector.load %arg6[%c0_39, %c0_40, %c0_41] : memref<2x32x32xf32, #tpu.memory_space<vmem>>, vector<1x32x32xf32>
    %102 = vector.shape_cast %101 : vector<1x32x32xf32> to vector<32x32xf32>
    %cst_42 = arith.constant dense<0.000000e+00> : vector<16x32xf32>
    %103 = tpu.matmul %100, %102, %cst_42 {dimension_numbers = #tpu.dot_dimension_numbers<[1], [0], [0], [1], [0, 0, 1, 1], [], []>} : vector<16x32xf32>, vector<32x32xf32>, vector<16x32xf32> -> vector<16x32xf32>
    %c0_43 = arith.constant 0 : index
    %c0_44 = arith.constant 0 : index
    %c0_45 = arith.constant 0 : index
    %104 = vector.load %arg7[%c0_43, %c0_44, %c0_45] : memref<2x1x32xf32, #tpu.memory_space<vmem>>, vector<1x1x32xf32>
    %105 = vector.shape_cast %104 : vector<1x1x32xf32> to vector<1x32xf32>
    %106 = vector.broadcast %105 : vector<1x32xf32> to vector<16x32xf32>
    %107 = arith.addf %103, %106 : vector<16x32xf32>
    %108 = arith.addf %107, %9 : vector<16x32xf32>
    %c0_46 = arith.constant 0 : index
    %c0_47 = arith.constant 0 : index
    %c0_48 = arith.constant 0 : index
    %109 = vector.load %arg8[%c0_46, %c0_47, %c0_48] : memref<2x1x32xf32, #tpu.memory_space<vmem>>, vector<1x1x32xf32>
    %110 = vector.shape_cast %109 : vector<1x1x32xf32> to vector<1x32xf32>
    %c0_49 = arith.constant 0 : index
    %c0_50 = arith.constant 0 : index
    %c0_51 = arith.constant 0 : index
    %111 = vector.load %arg9[%c0_49, %c0_50, %c0_51] : memref<2x1x32xf32, #tpu.memory_space<vmem>>, vector<1x1x32xf32>
    %112 = vector.shape_cast %111 : vector<1x1x32xf32> to vector<1x32xf32>
    %cst_52 = arith.constant dense<0.000000e+00> : vector<16xf32>
    %113 = vector.multi_reduction <add>, %108, %cst_52 [1] : vector<16x32xf32> to vector<16xf32>
    %114 = vector.shape_cast %113 : vector<16xf32> to vector<16x1xf32>
    %cst_53 = arith.constant 3.200000e+01 : f32
    %115 = vector.broadcast %cst_53 : f32 to vector<16x1xf32>
    %116 = arith.divf %114, %115 : vector<16x1xf32>
    %117 = vector.broadcast %116 : vector<16x1xf32> to vector<16x32xf32>
    %118 = arith.subf %108, %117 : vector<16x32xf32>
    %119 = arith.mulf %118, %118 : vector<16x32xf32>
    %cst_54 = arith.constant dense<0.000000e+00> : vector<16xf32>
    %120 = vector.multi_reduction <add>, %119, %cst_54 [1] : vector<16x32xf32> to vector<16xf32>
    %121 = vector.shape_cast %120 : vector<16xf32> to vector<16x1xf32>
    %cst_55 = arith.constant 3.200000e+01 : f32
    %122 = vector.broadcast %cst_55 : f32 to vector<16x1xf32>
    %123 = arith.divf %121, %122 : vector<16x1xf32>
    %124 = vector.broadcast %116 : vector<16x1xf32> to vector<16x32xf32>
    %125 = arith.subf %108, %124 : vector<16x32xf32>
    %cst_56 = arith.constant 9.99999997E-7 : f32
    %126 = vector.broadcast %cst_56 : f32 to vector<16x1xf32>
    %127 = arith.addf %123, %126 : vector<16x1xf32>
    %128 = math.rsqrt %127 : vector<16x1xf32>
    %129 = vector.broadcast %128 : vector<16x1xf32> to vector<16x32xf32>
    %130 = arith.mulf %125, %129 : vector<16x32xf32>
    %131 = vector.broadcast %110 : vector<1x32xf32> to vector<16x32xf32>
    %132 = arith.mulf %130, %131 : vector<16x32xf32>
    %133 = vector.broadcast %112 : vector<1x32xf32> to vector<16x32xf32>
    %134 = arith.addf %132, %133 : vector<16x32xf32>
    %c0_57 = arith.constant 0 : index
    %c0_58 = arith.constant 0 : index
    %c0_59 = arith.constant 0 : index
    %135 = vector.load %arg10[%c0_57, %c0_58, %c0_59] : memref<2x32x64xf32, #tpu.memory_space<vmem>>, vector<1x32x64xf32>
    %136 = vector.shape_cast %135 : vector<1x32x64xf32> to vector<32x64xf32>
    %cst_60 = arith.constant dense<0.000000e+00> : vector<16x64xf32>
    %137 = tpu.matmul %134, %136, %cst_60 {dimension_numbers = #tpu.dot_dimension_numbers<[1], [0], [0], [1], [0, 0, 1, 1], [], []>} : vector<16x32xf32>, vector<32x64xf32>, vector<16x64xf32> -> vector<16x64xf32>
    %c0_61 = arith.constant 0 : index
    %c0_62 = arith.constant 0 : index
    %c0_63 = arith.constant 0 : index
    %138 = vector.load %arg11[%c0_61, %c0_62, %c0_63] : memref<2x1x64xf32, #tpu.memory_space<vmem>>, vector<1x1x64xf32>
    %139 = vector.shape_cast %138 : vector<1x1x64xf32> to vector<1x64xf32>
    %140 = vector.broadcast %139 : vector<1x64xf32> to vector<16x64xf32>
    %141 = arith.addf %137, %140 : vector<16x64xf32>
    %cst_64 = arith.constant 0.000000e+00 : f32
    %142 = vector.broadcast %cst_64 : f32 to vector<16x64xf32>
    %143 = arith.maximumf %141, %142 : vector<16x64xf32>
    %c0_65 = arith.constant 0 : index
    %c0_66 = arith.constant 0 : index
    %c0_67 = arith.constant 0 : index
    %144 = vector.load %arg12[%c0_65, %c0_66, %c0_67] : memref<2x64x32xf32, #tpu.memory_space<vmem>>, vector<1x64x32xf32>
    %145 = vector.shape_cast %144 : vector<1x64x32xf32> to vector<64x32xf32>
    %cst_68 = arith.constant dense<0.000000e+00> : vector<16x32xf32>
    %146 = tpu.matmul %143, %145, %cst_68 {dimension_numbers = #tpu.dot_dimension_numbers<[1], [0], [0], [1], [0, 0, 1, 1], [], []>} : vector<16x64xf32>, vector<64x32xf32>, vector<16x32xf32> -> vector<16x32xf32>
    %c0_69 = arith.constant 0 : index
    %c0_70 = arith.constant 0 : index
    %c0_71 = arith.constant 0 : index
    %147 = vector.load %arg13[%c0_69, %c0_70, %c0_71] : memref<2x1x32xf32, #tpu.memory_space<vmem>>, vector<1x1x32xf32>
    %148 = vector.shape_cast %147 : vector<1x1x32xf32> to vector<1x32xf32>
    %149 = vector.broadcast %148 : vector<1x32xf32> to vector<16x32xf32>
    %150 = arith.addf %146, %149 : vector<16x32xf32>
    %151 = arith.addf %150, %134 : vector<16x32xf32>
    %c0_72 = arith.constant 0 : index
    %c0_73 = arith.constant 0 : index
    %c0_74 = arith.constant 0 : index
    %152 = vector.load %arg14[%c0_72, %c0_73, %c0_74] : memref<2x1x32xf32, #tpu.memory_space<vmem>>, vector<1x1x32xf32>
    %153 = vector.shape_cast %152 : vector<1x1x32xf32> to vector<1x32xf32>
    %c0_75 = arith.constant 0 : index
    %c0_76 = arith.constant 0 : index
    %c0_77 = arith.constant 0 : index
    %154 = vector.load %arg15[%c0_75, %c0_76, %c0_77] : memref<2x1x32xf32, #tpu.memory_space<vmem>>, vector<1x1x32xf32>
    %155 = vector.shape_cast %154 : vector<1x1x32xf32> to vector<1x32xf32>
    %cst_78 = arith.constant dense<0.000000e+00> : vector<16xf32>
    %156 = vector.multi_reduction <add>, %151, %cst_78 [1] : vector<16x32xf32> to vector<16xf32>
    %157 = vector.shape_cast %156 : vector<16xf32> to vector<16x1xf32>
    %cst_79 = arith.constant 3.200000e+01 : f32
    %158 = vector.broadcast %cst_79 : f32 to vector<16x1xf32>
    %159 = arith.divf %157, %158 : vector<16x1xf32>
    %160 = vector.broadcast %159 : vector<16x1xf32> to vector<16x32xf32>
    %161 = arith.subf %151, %160 : vector<16x32xf32>
    %162 = arith.mulf %161, %161 : vector<16x32xf32>
    %cst_80 = arith.constant dense<0.000000e+00> : vector<16xf32>
    %163 = vector.multi_reduction <add>, %162, %cst_80 [1] : vector<16x32xf32> to vector<16xf32>
    %164 = vector.shape_cast %163 : vector<16xf32> to vector<16x1xf32>
    %cst_81 = arith.constant 3.200000e+01 : f32
    %165 = vector.broadcast %cst_81 : f32 to vector<16x1xf32>
    %166 = arith.divf %164, %165 : vector<16x1xf32>
    %167 = vector.broadcast %159 : vector<16x1xf32> to vector<16x32xf32>
    %168 = arith.subf %151, %167 : vector<16x32xf32>
    %cst_82 = arith.constant 9.99999997E-7 : f32
    %169 = vector.broadcast %cst_82 : f32 to vector<16x1xf32>
    %170 = arith.addf %166, %169 : vector<16x1xf32>
    %171 = math.rsqrt %170 : vector<16x1xf32>
    %172 = vector.broadcast %171 : vector<16x1xf32> to vector<16x32xf32>
    %173 = arith.mulf %168, %172 : vector<16x32xf32>
    %174 = vector.broadcast %153 : vector<1x32xf32> to vector<16x32xf32>
    %175 = arith.mulf %173, %174 : vector<16x32xf32>
    %176 = vector.broadcast %155 : vector<1x32xf32> to vector<16x32xf32>
    %177 = arith.addf %175, %176 : vector<16x32xf32>
    %c1 = arith.constant 1 : index
    %c0_83 = arith.constant 0 : index
    %c0_84 = arith.constant 0 : index
    %178 = vector.load %arg4[%c1, %c0_83, %c0_84] : memref<2x32x96xf32, #tpu.memory_space<vmem>>, vector<1x32x96xf32>
    %179 = vector.shape_cast %178 : vector<1x32x96xf32> to vector<32x96xf32>
    %cst_85 = arith.constant dense<0.000000e+00> : vector<16x96xf32>
    %180 = tpu.matmul %177, %179, %cst_85 {dimension_numbers = #tpu.dot_dimension_numbers<[1], [0], [0], [1], [0, 0, 1, 1], [], []>} : vector<16x32xf32>, vector<32x96xf32>, vector<16x96xf32> -> vector<16x96xf32>
    %c1_86 = arith.constant 1 : index
    %c0_87 = arith.constant 0 : index
    %c0_88 = arith.constant 0 : index
    %181 = vector.load %arg5[%c1_86, %c0_87, %c0_88] : memref<2x1x96xf32, #tpu.memory_space<vmem>>, vector<1x1x96xf32>
    %182 = vector.shape_cast %181 : vector<1x1x96xf32> to vector<1x96xf32>
    %183 = vector.broadcast %182 : vector<1x96xf32> to vector<16x96xf32>
    %184 = arith.addf %180, %183 : vector<16x96xf32>
    %185 = vector.shape_cast %184 : vector<16x96xf32> to vector<2x8x96xf32>
    %186 = vector.extract_strided_slice %185 {offsets = [0, 0, 0], sizes = [2, 8, 8], strides = [1, 1, 1]} : vector<2x8x96xf32> to vector<2x8x8xf32>
    %187 = vector.extract_strided_slice %185 {offsets = [0, 0, 32], sizes = [2, 8, 8], strides = [1, 1, 1]} : vector<2x8x96xf32> to vector<2x8x8xf32>
    %188 = vector.extract_strided_slice %185 {offsets = [0, 0, 64], sizes = [2, 8, 8], strides = [1, 1, 1]} : vector<2x8x96xf32> to vector<2x8x8xf32>
    "tpu.trace_start"() <{level = 10 : i32, message = "bqd,bkd->bqk"}> : () -> ()
    %cst_89 = arith.constant dense<0.000000e+00> : vector<2x8x8xf32>
    %189 = tpu.matmul %186, %187, %cst_89 {dimension_numbers = #tpu.dot_dimension_numbers<[2], [2], [1], [1], [0, 0, 0, 1, 1, 1], [0], [0]>} : vector<2x8x8xf32>, vector<2x8x8xf32>, vector<2x8x8xf32> -> vector<2x8x8xf32>
    "tpu.trace_stop"() : () -> ()
    %190 = vector.broadcast %10 : vector<2x1x8xf32> to vector<2x8x8xf32>
    %191 = arith.addf %189, %190 : vector<2x8x8xf32>
    %cst_90 = arith.constant 0.176776692 : f32
    %192 = vector.broadcast %cst_90 : f32 to vector<2x8x8xf32>
    %193 = arith.mulf %191, %192 : vector<2x8x8xf32>
    %cst_91 = arith.constant dense<0xFF800000> : vector<2x8xf32>
    %194 = vector.multi_reduction <maximumf>, %193, %cst_91 [2] : vector<2x8x8xf32> to vector<2x8xf32>
    %cst_92 = arith.constant 0xFF800000 : f32
    %195 = vector.broadcast %cst_92 : f32 to vector<2x8xf32>
    %196 = arith.maximumf %195, %194 : vector<2x8xf32>
    %197 = vector.shape_cast %196 : vector<2x8xf32> to vector<2x8x1xf32>
    %198 = vector.broadcast %197 : vector<2x8x1xf32> to vector<2x8x8xf32>
    %199 = arith.subf %193, %198 : vector<2x8x8xf32>
    %200 = math.exp %199 : vector<2x8x8xf32>
    %cst_93 = arith.constant dense<0.000000e+00> : vector<2x8xf32>
    %201 = vector.multi_reduction <add>, %200, %cst_93 [2] : vector<2x8x8xf32> to vector<2x8xf32>
    %202 = vector.shape_cast %201 : vector<2x8xf32> to vector<2x8x1xf32>
    %203 = vector.broadcast %202 : vector<2x8x1xf32> to vector<2x8x8xf32>
    %204 = arith.divf %200, %203 : vector<2x8x8xf32>
    "tpu.trace_start"() <{level = 10 : i32, message = "bqk,bkd->bqd"}> : () -> ()
    %cst_94 = arith.constant dense<0.000000e+00> : vector<2x8x8xf32>
    %205 = tpu.matmul %204, %188, %cst_94 {dimension_numbers = #tpu.dot_dimension_numbers<[2], [1], [1], [2], [0, 0, 0, 1, 1, 2], [0], [0]>} : vector<2x8x8xf32>, vector<2x8x8xf32>, vector<2x8x8xf32> -> vector<2x8x8xf32>
    "tpu.trace_stop"() : () -> ()
    %206 = vector.extract_strided_slice %185 {offsets = [0, 0, 8], sizes = [2, 8, 8], strides = [1, 1, 1]} : vector<2x8x96xf32> to vector<2x8x8xf32>
    %207 = vector.extract_strided_slice %185 {offsets = [0, 0, 40], sizes = [2, 8, 8], strides = [1, 1, 1]} : vector<2x8x96xf32> to vector<2x8x8xf32>
    %208 = vector.extract_strided_slice %185 {offsets = [0, 0, 72], sizes = [2, 8, 8], strides = [1, 1, 1]} : vector<2x8x96xf32> to vector<2x8x8xf32>
    "tpu.trace_start"() <{level = 10 : i32, message = "bqd,bkd->bqk"}> : () -> ()
    %cst_95 = arith.constant dense<0.000000e+00> : vector<2x8x8xf32>
    %209 = tpu.matmul %206, %207, %cst_95 {dimension_numbers = #tpu.dot_dimension_numbers<[2], [2], [1], [1], [0, 0, 0, 1, 1, 1], [0], [0]>} : vector<2x8x8xf32>, vector<2x8x8xf32>, vector<2x8x8xf32> -> vector<2x8x8xf32>
    "tpu.trace_stop"() : () -> ()
    %210 = vector.broadcast %10 : vector<2x1x8xf32> to vector<2x8x8xf32>
    %211 = arith.addf %209, %210 : vector<2x8x8xf32>
    %cst_96 = arith.constant 0.176776692 : f32
    %212 = vector.broadcast %cst_96 : f32 to vector<2x8x8xf32>
    %213 = arith.mulf %211, %212 : vector<2x8x8xf32>
    %cst_97 = arith.constant dense<0xFF800000> : vector<2x8xf32>
    %214 = vector.multi_reduction <maximumf>, %213, %cst_97 [2] : vector<2x8x8xf32> to vector<2x8xf32>
    %cst_98 = arith.constant 0xFF800000 : f32
    %215 = vector.broadcast %cst_98 : f32 to vector<2x8xf32>
    %216 = arith.maximumf %215, %214 : vector<2x8xf32>
    %217 = vector.shape_cast %216 : vector<2x8xf32> to vector<2x8x1xf32>
    %218 = vector.broadcast %217 : vector<2x8x1xf32> to vector<2x8x8xf32>
    %219 = arith.subf %213, %218 : vector<2x8x8xf32>
    %220 = math.exp %219 : vector<2x8x8xf32>
    %cst_99 = arith.constant dense<0.000000e+00> : vector<2x8xf32>
    %221 = vector.multi_reduction <add>, %220, %cst_99 [2] : vector<2x8x8xf32> to vector<2x8xf32>
    %222 = vector.shape_cast %221 : vector<2x8xf32> to vector<2x8x1xf32>
    %223 = vector.broadcast %222 : vector<2x8x1xf32> to vector<2x8x8xf32>
    %224 = arith.divf %220, %223 : vector<2x8x8xf32>
    "tpu.trace_start"() <{level = 10 : i32, message = "bqk,bkd->bqd"}> : () -> ()
    %cst_100 = arith.constant dense<0.000000e+00> : vector<2x8x8xf32>
    %225 = tpu.matmul %224, %208, %cst_100 {dimension_numbers = #tpu.dot_dimension_numbers<[2], [1], [1], [2], [0, 0, 0, 1, 1, 2], [0], [0]>} : vector<2x8x8xf32>, vector<2x8x8xf32>, vector<2x8x8xf32> -> vector<2x8x8xf32>
    "tpu.trace_stop"() : () -> ()
    %226 = vector.extract_strided_slice %185 {offsets = [0, 0, 16], sizes = [2, 8, 8], strides = [1, 1, 1]} : vector<2x8x96xf32> to vector<2x8x8xf32>
    %227 = vector.extract_strided_slice %185 {offsets = [0, 0, 48], sizes = [2, 8, 8], strides = [1, 1, 1]} : vector<2x8x96xf32> to vector<2x8x8xf32>
    %228 = vector.extract_strided_slice %185 {offsets = [0, 0, 80], sizes = [2, 8, 8], strides = [1, 1, 1]} : vector<2x8x96xf32> to vector<2x8x8xf32>
    "tpu.trace_start"() <{level = 10 : i32, message = "bqd,bkd->bqk"}> : () -> ()
    %cst_101 = arith.constant dense<0.000000e+00> : vector<2x8x8xf32>
    %229 = tpu.matmul %226, %227, %cst_101 {dimension_numbers = #tpu.dot_dimension_numbers<[2], [2], [1], [1], [0, 0, 0, 1, 1, 1], [0], [0]>} : vector<2x8x8xf32>, vector<2x8x8xf32>, vector<2x8x8xf32> -> vector<2x8x8xf32>
    "tpu.trace_stop"() : () -> ()
    %230 = vector.broadcast %10 : vector<2x1x8xf32> to vector<2x8x8xf32>
    %231 = arith.addf %229, %230 : vector<2x8x8xf32>
    %cst_102 = arith.constant 0.176776692 : f32
    %232 = vector.broadcast %cst_102 : f32 to vector<2x8x8xf32>
    %233 = arith.mulf %231, %232 : vector<2x8x8xf32>
    %cst_103 = arith.constant dense<0xFF800000> : vector<2x8xf32>
    %234 = vector.multi_reduction <maximumf>, %233, %cst_103 [2] : vector<2x8x8xf32> to vector<2x8xf32>
    %cst_104 = arith.constant 0xFF800000 : f32
    %235 = vector.broadcast %cst_104 : f32 to vector<2x8xf32>
    %236 = arith.maximumf %235, %234 : vector<2x8xf32>
    %237 = vector.shape_cast %236 : vector<2x8xf32> to vector<2x8x1xf32>
    %238 = vector.broadcast %237 : vector<2x8x1xf32> to vector<2x8x8xf32>
    %239 = arith.subf %233, %238 : vector<2x8x8xf32>
    %240 = math.exp %239 : vector<2x8x8xf32>
    %cst_105 = arith.constant dense<0.000000e+00> : vector<2x8xf32>
    %241 = vector.multi_reduction <add>, %240, %cst_105 [2] : vector<2x8x8xf32> to vector<2x8xf32>
    %242 = vector.shape_cast %241 : vector<2x8xf32> to vector<2x8x1xf32>
    %243 = vector.broadcast %242 : vector<2x8x1xf32> to vector<2x8x8xf32>
    %244 = arith.divf %240, %243 : vector<2x8x8xf32>
    "tpu.trace_start"() <{level = 10 : i32, message = "bqk,bkd->bqd"}> : () -> ()
    %cst_106 = arith.constant dense<0.000000e+00> : vector<2x8x8xf32>
    %245 = tpu.matmul %244, %228, %cst_106 {dimension_numbers = #tpu.dot_dimension_numbers<[2], [1], [1], [2], [0, 0, 0, 1, 1, 2], [0], [0]>} : vector<2x8x8xf32>, vector<2x8x8xf32>, vector<2x8x8xf32> -> vector<2x8x8xf32>
    "tpu.trace_stop"() : () -> ()
    %246 = vector.extract_strided_slice %185 {offsets = [0, 0, 24], sizes = [2, 8, 8], strides = [1, 1, 1]} : vector<2x8x96xf32> to vector<2x8x8xf32>
    %247 = vector.extract_strided_slice %185 {offsets = [0, 0, 56], sizes = [2, 8, 8], strides = [1, 1, 1]} : vector<2x8x96xf32> to vector<2x8x8xf32>
    %248 = vector.extract_strided_slice %185 {offsets = [0, 0, 88], sizes = [2, 8, 8], strides = [1, 1, 1]} : vector<2x8x96xf32> to vector<2x8x8xf32>
    "tpu.trace_start"() <{level = 10 : i32, message = "bqd,bkd->bqk"}> : () -> ()
    %cst_107 = arith.constant dense<0.000000e+00> : vector<2x8x8xf32>
    %249 = tpu.matmul %246, %247, %cst_107 {dimension_numbers = #tpu.dot_dimension_numbers<[2], [2], [1], [1], [0, 0, 0, 1, 1, 1], [0], [0]>} : vector<2x8x8xf32>, vector<2x8x8xf32>, vector<2x8x8xf32> -> vector<2x8x8xf32>
    "tpu.trace_stop"() : () -> ()
    %250 = vector.broadcast %10 : vector<2x1x8xf32> to vector<2x8x8xf32>
    %251 = arith.addf %249, %250 : vector<2x8x8xf32>
    %cst_108 = arith.constant 0.176776692 : f32
    %252 = vector.broadcast %cst_108 : f32 to vector<2x8x8xf32>
    %253 = arith.mulf %251, %252 : vector<2x8x8xf32>
    %cst_109 = arith.constant dense<0xFF800000> : vector<2x8xf32>
    %254 = vector.multi_reduction <maximumf>, %253, %cst_109 [2] : vector<2x8x8xf32> to vector<2x8xf32>
    %cst_110 = arith.constant 0xFF800000 : f32
    %255 = vector.broadcast %cst_110 : f32 to vector<2x8xf32>
    %256 = arith.maximumf %255, %254 : vector<2x8xf32>
    %257 = vector.shape_cast %256 : vector<2x8xf32> to vector<2x8x1xf32>
    %258 = vector.broadcast %257 : vector<2x8x1xf32> to vector<2x8x8xf32>
    %259 = arith.subf %253, %258 : vector<2x8x8xf32>
    %260 = math.exp %259 : vector<2x8x8xf32>
    %cst_111 = arith.constant dense<0.000000e+00> : vector<2x8xf32>
    %261 = vector.multi_reduction <add>, %260, %cst_111 [2] : vector<2x8x8xf32> to vector<2x8xf32>
    %262 = vector.shape_cast %261 : vector<2x8xf32> to vector<2x8x1xf32>
    %263 = vector.broadcast %262 : vector<2x8x1xf32> to vector<2x8x8xf32>
    %264 = arith.divf %260, %263 : vector<2x8x8xf32>
    "tpu.trace_start"() <{level = 10 : i32, message = "bqk,bkd->bqd"}> : () -> ()
    %cst_112 = arith.constant dense<0.000000e+00> : vector<2x8x8xf32>
    %265 = tpu.matmul %264, %248, %cst_112 {dimension_numbers = #tpu.dot_dimension_numbers<[2], [1], [1], [2], [0, 0, 0, 1, 1, 2], [0], [0]>} : vector<2x8x8xf32>, vector<2x8x8xf32>, vector<2x8x8xf32> -> vector<2x8x8xf32>
    "tpu.trace_stop"() : () -> ()
    %266 = tpu.concatenate %205, %225, %245, %265 in 2 : vector<2x8x8xf32>, vector<2x8x8xf32>, vector<2x8x8xf32>, vector<2x8x8xf32> -> vector<2x8x32xf32>
    %267 = vector.shape_cast %266 : vector<2x8x32xf32> to vector<16x32xf32>
    %c1_113 = arith.constant 1 : index
    %c0_114 = arith.constant 0 : index
    %c0_115 = arith.constant 0 : index
    %268 = vector.load %arg6[%c1_113, %c0_114, %c0_115] : memref<2x32x32xf32, #tpu.memory_space<vmem>>, vector<1x32x32xf32>
    %269 = vector.shape_cast %268 : vector<1x32x32xf32> to vector<32x32xf32>
    %cst_116 = arith.constant dense<0.000000e+00> : vector<16x32xf32>
    %270 = tpu.matmul %267, %269, %cst_116 {dimension_numbers = #tpu.dot_dimension_numbers<[1], [0], [0], [1], [0, 0, 1, 1], [], []>} : vector<16x32xf32>, vector<32x32xf32>, vector<16x32xf32> -> vector<16x32xf32>
    %c1_117 = arith.constant 1 : index
    %c0_118 = arith.constant 0 : index
    %c0_119 = arith.constant 0 : index
    %271 = vector.load %arg7[%c1_117, %c0_118, %c0_119] : memref<2x1x32xf32, #tpu.memory_space<vmem>>, vector<1x1x32xf32>
    %272 = vector.shape_cast %271 : vector<1x1x32xf32> to vector<1x32xf32>
    %273 = vector.broadcast %272 : vector<1x32xf32> to vector<16x32xf32>
    %274 = arith.addf %270, %273 : vector<16x32xf32>
    %275 = arith.addf %274, %177 : vector<16x32xf32>
    %c1_120 = arith.constant 1 : index
    %c0_121 = arith.constant 0 : index
    %c0_122 = arith.constant 0 : index
    %276 = vector.load %arg8[%c1_120, %c0_121, %c0_122] : memref<2x1x32xf32, #tpu.memory_space<vmem>>, vector<1x1x32xf32>
    %277 = vector.shape_cast %276 : vector<1x1x32xf32> to vector<1x32xf32>
    %c1_123 = arith.constant 1 : index
    %c0_124 = arith.constant 0 : index
    %c0_125 = arith.constant 0 : index
    %278 = vector.load %arg9[%c1_123, %c0_124, %c0_125] : memref<2x1x32xf32, #tpu.memory_space<vmem>>, vector<1x1x32xf32>
    %279 = vector.shape_cast %278 : vector<1x1x32xf32> to vector<1x32xf32>
    %cst_126 = arith.constant dense<0.000000e+00> : vector<16xf32>
    %280 = vector.multi_reduction <add>, %275, %cst_126 [1] : vector<16x32xf32> to vector<16xf32>
    %281 = vector.shape_cast %280 : vector<16xf32> to vector<16x1xf32>
    %cst_127 = arith.constant 3.200000e+01 : f32
    %282 = vector.broadcast %cst_127 : f32 to vector<16x1xf32>
    %283 = arith.divf %281, %282 : vector<16x1xf32>
    %284 = vector.broadcast %283 : vector<16x1xf32> to vector<16x32xf32>
    %285 = arith.subf %275, %284 : vector<16x32xf32>
    %286 = arith.mulf %285, %285 : vector<16x32xf32>
    %cst_128 = arith.constant dense<0.000000e+00> : vector<16xf32>
    %287 = vector.multi_reduction <add>, %286, %cst_128 [1] : vector<16x32xf32> to vector<16xf32>
    %288 = vector.shape_cast %287 : vector<16xf32> to vector<16x1xf32>
    %cst_129 = arith.constant 3.200000e+01 : f32
    %289 = vector.broadcast %cst_129 : f32 to vector<16x1xf32>
    %290 = arith.divf %288, %289 : vector<16x1xf32>
    %291 = vector.broadcast %283 : vector<16x1xf32> to vector<16x32xf32>
    %292 = arith.subf %275, %291 : vector<16x32xf32>
    %cst_130 = arith.constant 9.99999997E-7 : f32
    %293 = vector.broadcast %cst_130 : f32 to vector<16x1xf32>
    %294 = arith.addf %290, %293 : vector<16x1xf32>
    %295 = math.rsqrt %294 : vector<16x1xf32>
    %296 = vector.broadcast %295 : vector<16x1xf32> to vector<16x32xf32>
    %297 = arith.mulf %292, %296 : vector<16x32xf32>
    %298 = vector.broadcast %277 : vector<1x32xf32> to vector<16x32xf32>
    %299 = arith.mulf %297, %298 : vector<16x32xf32>
    %300 = vector.broadcast %279 : vector<1x32xf32> to vector<16x32xf32>
    %301 = arith.addf %299, %300 : vector<16x32xf32>
    %c1_131 = arith.constant 1 : index
    %c0_132 = arith.constant 0 : index
    %c0_133 = arith.constant 0 : index
    %302 = vector.load %arg10[%c1_131, %c0_132, %c0_133] : memref<2x32x64xf32, #tpu.memory_space<vmem>>, vector<1x32x64xf32>
    %303 = vector.shape_cast %302 : vector<1x32x64xf32> to vector<32x64xf32>
    %cst_134 = arith.constant dense<0.000000e+00> : vector<16x64xf32>
    %304 = tpu.matmul %301, %303, %cst_134 {dimension_numbers = #tpu.dot_dimension_numbers<[1], [0], [0], [1], [0, 0, 1, 1], [], []>} : vector<16x32xf32>, vector<32x64xf32>, vector<16x64xf32> -> vector<16x64xf32>
    %c1_135 = arith.constant 1 : index
    %c0_136 = arith.constant 0 : index
    %c0_137 = arith.constant 0 : index
    %305 = vector.load %arg11[%c1_135, %c0_136, %c0_137] : memref<2x1x64xf32, #tpu.memory_space<vmem>>, vector<1x1x64xf32>
    %306 = vector.shape_cast %305 : vector<1x1x64xf32> to vector<1x64xf32>
    %307 = vector.broadcast %306 : vector<1x64xf32> to vector<16x64xf32>
    %308 = arith.addf %304, %307 : vector<16x64xf32>
    %cst_138 = arith.constant 0.000000e+00 : f32
    %309 = vector.broadcast %cst_138 : f32 to vector<16x64xf32>
    %310 = arith.maximumf %308, %309 : vector<16x64xf32>
    %c1_139 = arith.constant 1 : index
    %c0_140 = arith.constant 0 : index
    %c0_141 = arith.constant 0 : index
    %311 = vector.load %arg12[%c1_139, %c0_140, %c0_141] : memref<2x64x32xf32, #tpu.memory_space<vmem>>, vector<1x64x32xf32>
    %312 = vector.shape_cast %311 : vector<1x64x32xf32> to vector<64x32xf32>
    %cst_142 = arith.constant dense<0.000000e+00> : vector<16x32xf32>
    %313 = tpu.matmul %310, %312, %cst_142 {dimension_numbers = #tpu.dot_dimension_numbers<[1], [0], [0], [1], [0, 0, 1, 1], [], []>} : vector<16x64xf32>, vector<64x32xf32>, vector<16x32xf32> -> vector<16x32xf32>
    %c1_143 = arith.constant 1 : index
    %c0_144 = arith.constant 0 : index
    %c0_145 = arith.constant 0 : index
    %314 = vector.load %arg13[%c1_143, %c0_144, %c0_145] : memref<2x1x32xf32, #tpu.memory_space<vmem>>, vector<1x1x32xf32>
    %315 = vector.shape_cast %314 : vector<1x1x32xf32> to vector<1x32xf32>
    %316 = vector.broadcast %315 : vector<1x32xf32> to vector<16x32xf32>
    %317 = arith.addf %313, %316 : vector<16x32xf32>
    %318 = arith.addf %317, %301 : vector<16x32xf32>
    %c1_146 = arith.constant 1 : index
    %c0_147 = arith.constant 0 : index
    %c0_148 = arith.constant 0 : index
    %319 = vector.load %arg14[%c1_146, %c0_147, %c0_148] : memref<2x1x32xf32, #tpu.memory_space<vmem>>, vector<1x1x32xf32>
    %320 = vector.shape_cast %319 : vector<1x1x32xf32> to vector<1x32xf32>
    %c1_149 = arith.constant 1 : index
    %c0_150 = arith.constant 0 : index
    %c0_151 = arith.constant 0 : index
    %321 = vector.load %arg15[%c1_149, %c0_150, %c0_151] : memref<2x1x32xf32, #tpu.memory_space<vmem>>, vector<1x1x32xf32>
    %322 = vector.shape_cast %321 : vector<1x1x32xf32> to vector<1x32xf32>
    %cst_152 = arith.constant dense<0.000000e+00> : vector<16xf32>
    %323 = vector.multi_reduction <add>, %318, %cst_152 [1] : vector<16x32xf32> to vector<16xf32>
    %324 = vector.shape_cast %323 : vector<16xf32> to vector<16x1xf32>
    %cst_153 = arith.constant 3.200000e+01 : f32
    %325 = vector.broadcast %cst_153 : f32 to vector<16x1xf32>
    %326 = arith.divf %324, %325 : vector<16x1xf32>
    %327 = vector.broadcast %326 : vector<16x1xf32> to vector<16x32xf32>
    %328 = arith.subf %318, %327 : vector<16x32xf32>
    %329 = arith.mulf %328, %328 : vector<16x32xf32>
    %cst_154 = arith.constant dense<0.000000e+00> : vector<16xf32>
    %330 = vector.multi_reduction <add>, %329, %cst_154 [1] : vector<16x32xf32> to vector<16xf32>
    %331 = vector.shape_cast %330 : vector<16xf32> to vector<16x1xf32>
    %cst_155 = arith.constant 3.200000e+01 : f32
    %332 = vector.broadcast %cst_155 : f32 to vector<16x1xf32>
    %333 = arith.divf %331, %332 : vector<16x1xf32>
    %334 = vector.broadcast %326 : vector<16x1xf32> to vector<16x32xf32>
    %335 = arith.subf %318, %334 : vector<16x32xf32>
    %cst_156 = arith.constant 9.99999997E-7 : f32
    %336 = vector.broadcast %cst_156 : f32 to vector<16x1xf32>
    %337 = arith.addf %333, %336 : vector<16x1xf32>
    %338 = math.rsqrt %337 : vector<16x1xf32>
    %339 = vector.broadcast %338 : vector<16x1xf32> to vector<16x32xf32>
    %340 = arith.mulf %335, %339 : vector<16x32xf32>
    %341 = vector.broadcast %320 : vector<1x32xf32> to vector<16x32xf32>
    %342 = arith.mulf %340, %341 : vector<16x32xf32>
    %343 = vector.broadcast %322 : vector<1x32xf32> to vector<16x32xf32>
    %344 = arith.addf %342, %343 : vector<16x32xf32>
    %345 = vector.shape_cast %344 : vector<16x32xf32> to vector<2x8x32xf32>
    %346 = vector.extract_strided_slice %345 {offsets = [0, 0, 0], sizes = [2, 1, 32], strides = [1, 1, 1]} : vector<2x8x32xf32> to vector<2x1x32xf32>
    %347 = vector.shape_cast %346 : vector<2x1x32xf32> to vector<2x32xf32>
    %c0_157 = arith.constant 0 : index
    %c0_158 = arith.constant 0 : index
    %348 = vector.load %arg16[%c0_157, %c0_158] : memref<32x2xf32, #tpu.memory_space<vmem>>, vector<32x2xf32>
    %cst_159 = arith.constant dense<0.000000e+00> : vector<2x2xf32>
    %349 = tpu.matmul %347, %348, %cst_159 {dimension_numbers = #tpu.dot_dimension_numbers<[1], [0], [0], [1], [0, 0, 1, 1], [], []>} : vector<2x32xf32>, vector<32x2xf32>, vector<2x2xf32> -> vector<2x2xf32>
    %c0_160 = arith.constant 0 : index
    %c0_161 = arith.constant 0 : index
    %350 = vector.load %arg17[%c0_160, %c0_161] : memref<1x2xf32, #tpu.memory_space<vmem>>, vector<1x2xf32>
    %351 = vector.broadcast %350 : vector<1x2xf32> to vector<2x2xf32>
    %352 = arith.addf %349, %351 : vector<2x2xf32>
    %c0_162 = arith.constant 0 : index
    %c0_163 = arith.constant 0 : index
    %353 = vector.load %arg18[%c0_162, %c0_163] : memref<2x2xf32, #tpu.memory_space<vmem>>, vector<2x2xf32>
    tpu.vector_store %arg18[%c0_162, %c0_163], %352 {strides = array<i32>} : memref<2x2xf32, #tpu.memory_space<vmem>>, vector<2x2xf32>,
    return
  }
}

</mosaic_0001>

<llo_original>
// kernel: encoder_forward.1
$region0: #{encoder_forward.1}
  #allocation0 [shape = 'u32[]', space=smem, size = 0x4, offset = 0x4, fixed_abs, tag = 'smem constant byte address 0x4 - core index']
  #allocation1 [shape = 'u32[72,128]{1,0:T(1,128)}', space=vmem, size = 0x9000, scoped, tag = 'internal scratch']
  %s0 = inlined_call_operand.vmem [shape: s32[16,1], index: 0, kind: input, shape index: {}]
  %s1 = inlined_call_operand.vmem [shape: f32[16,32], index: 1, kind: input, shape index: {}]
  %s2 = inlined_call_operand.vmem [shape: f32[2,1,8], index: 2, kind: input, shape index: {}]
  %s3 = inlined_call_operand.vmem [shape: f32[64,32], index: 3, kind: input, shape index: {}]
  %s4 = inlined_call_operand.vmem [shape: f32[2,32,96], index: 4, kind: input, shape index: {}]
  %s5 = inlined_call_operand.vmem [shape: f32[2,1,96], index: 5, kind: input, shape index: {}]
  %s6 = inlined_call_operand.vmem [shape: f32[2,32,32], index: 6, kind: input, shape index: {}]
  %s7 = inlined_call_operand.vmem [shape: f32[2,1,32], index: 7, kind: input, shape index: {}]
  %s8 = inlined_call_operand.vmem [shape: f32[2,1,32], index: 8, kind: input, shape index: {}]
  %s9 = inlined_call_operand.vmem [shape: f32[2,1,32], index: 9, kind: input, shape index: {}]
  %s10 = inlined_call_operand.vmem [shape: f32[2,32,64], index: 10, kind: input, shape index: {}]
  %s11 = inlined_call_operand.vmem [shape: f32[2,1,64], index: 11, kind: input, shape index: {}]
  %s12 = inlined_call_operand.vmem [shape: f32[2,64,32], index: 12, kind: input, shape index: {}]
  %s13 = inlined_call_operand.vmem [shape: f32[2,1,32], index: 13, kind: input, shape index: {}]
  %s14 = inlined_call_operand.vmem [shape: f32[2,1,32], index: 14, kind: input, shape index: {}]
  %s15 = inlined_call_operand.vmem [shape: f32[2,1,32], index: 15, kind: input, shape index: {}]
  %s16 = inlined_call_operand.vmem [shape: f32[32,2], index: 16, kind: input, shape index: {}]
  %s17 = inlined_call_operand.vmem [shape: f32[1,2], index: 17, kind: input, shape index: {}]
  %s18 = inlined_call_operand.hbm [shape: f32[2,2], index: 18, kind: output, shape index: {}]
  %s19 = sld [smem:[#allocation0]]
  $region82: #{encoder_forward.1} parent=0
    _
  %s21 = ssub.s32 1, %s19
  %s22 = scalar_select 0, %s21, %s19
  $region1: #{encoder_forward.1} parent=0
    #allocation2 [shape = 'u8[1024]{0}', space=vmem, size = 0x400, scoped, tag = 'output window, operand 0, single buffered']
    #allocation3 [shape = 's32[1]{0}', space=sflag, size = 0x4, scoped, tag = 'scoped memory for encoder_forward.1']
    %23 = vsyncpa [#allocation3], 0
    // Predicated region
    $region2: #{encoder_forward.1} parent=1 // pred_check
      _
    $region3: #{encoder_forward.1} parent=1 // pred_check_branch
      %25 = sbr.rel (0) target = $region5
    $region4: #{encoder_forward.1} parent=1 // pred_region
      _
    $region5: #{encoder_forward.1} parent=1 // pred_fallthru
      _
    // Predicated region
    $region6: #{encoder_forward.1} parent=1 // pred_check
      _
    $region7: #{encoder_forward.1} parent=1 // pred_check_branch
      %27 = sbr.rel (0) target = $region9
    $region8: #{encoder_forward.1} parent=1 // pred_region
      _
    $region9: #{encoder_forward.1} parent=1 // pred_fallthru
      _
    // Predicated region
    $region10: #{encoder_forward.1} parent=1 // pred_check
      _
    $region11: #{encoder_forward.1} parent=1 // pred_check_branch
      %29 = sbr.rel (0) target = $region13
    $region12: #{encoder_forward.1} parent=1 // pred_region
      _
    $region13: #{encoder_forward.1} parent=1 // pred_fallthru
      _
    // Predicated region
    $region14: #{encoder_forward.1} parent=1 // pred_check
      _
    $region15: #{encoder_forward.1} parent=1 // pred_check_branch
      %31 = sbr.rel (0) target = $region17
    $region16: #{encoder_forward.1} parent=1 // pred_region
      _
    $region17: #{encoder_forward.1} parent=1 // pred_fallthru
      _
    // Predicated region
    $region18: #{encoder_forward.1} parent=1 // pred_check
      _
    $region19: #{encoder_forward.1} parent=1 // pred_check_branch
      %33 = sbr.rel (0) target = $region21
    $region20: #{encoder_forward.1} parent=1 // pred_region
      _
    $region21: #{encoder_forward.1} parent=1 // pred_fallthru
      _
    // Predicated region
    $region22: #{encoder_forward.1} parent=1 // pred_check
      _
    $region23: #{encoder_forward.1} parent=1 // pred_check_branch
      %35 = sbr.rel (0) target = $region25
    $region24: #{encoder_forward.1} parent=1 // pred_region
      _
    $region25: #{encoder_forward.1} parent=1 // pred_fallthru
      _
    // Predicated region
    $region26: #{encoder_forward.1} parent=1 // pred_check
      _
    $region27: #{encoder_forward.1} parent=1 // pred_check_branch
      %37 = sbr.rel (0) target = $region29
    $region28: #{encoder_forward.1} parent=1 // pred_region
      _
    $region29: #{encoder_forward.1} parent=1 // pred_fallthru
      _
    // Predicated region
    $region30: #{encoder_forward.1} parent=1 // pred_check
      _
    $region31: #{encoder_forward.1} parent=1 // pred_check_branch
      %39 = sbr.rel (0) target = $region33
    $region32: #{encoder_forward.1} parent=1 // pred_region
      _
    $region33: #{encoder_forward.1} parent=1 // pred_fallthru
      _
    // Predicated region
    $region34: #{encoder_forward.1} parent=1 // pred_check
      _
    $region35: #{encoder_forward.1} parent=1 // pred_check_branch
      %41 = sbr.rel (0) target = $region37
    $region36: #{encoder_forward.1} parent=1 // pred_region
      _
    $region37: #{encoder_forward.1} parent=1 // pred_fallthru
      _
    // Predicated region
    $region38: #{encoder_forward.1} parent=1 // pred_check
      _
    $region39: #{encoder_forward.1} parent=1 // pred_check_branch
      %43 = sbr.rel (0) target = $region41
    $region40: #{encoder_forward.1} parent=1 // pred_region
      _
    $region41: #{encoder_forward.1} parent=1 // pred_fallthru
      _
    // Predicated region
    $region42: #{encoder_forward.1} parent=1 // pred_check
      _
    $region43: #{encoder_forward.1} parent=1 // pred_check_branch
      %45 = sbr.rel (0) target = $region45
    $region44: #{encoder_forward.1} parent=1 // pred_region
      _
    $region45: #{encoder_forward.1} parent=1 // pred_fallthru
      _
    // Predicated region
    $region46: #{encoder_forward.1} parent=1 // pred_check
      _
    $region47: #{encoder_forward.1} parent=1 // pred_check_branch
      %47 = sbr.rel (0) target = $region49
    $region48: #{encoder_forward.1} parent=1 // pred_region
      _
    $region49: #{encoder_forward.1} parent=1 // pred_fallthru
      _
    // Predicated region
    $region50: #{encoder_forward.1} parent=1 // pred_check
      _
    $region51: #{encoder_forward.1} parent=1 // pred_check_branch
      %49 = sbr.rel (0) target = $region53
    $region52: #{encoder_forward.1} parent=1 // pred_region
      _
    $region53: #{encoder_forward.1} parent=1 // pred_fallthru
      _
    // Predicated region
    $region54: #{encoder_forward.1} parent=1 // pred_check
      _
    $region55: #{encoder_forward.1} parent=1 // pred_check_branch
      %51 = sbr.rel (0) target = $region57
    $region56: #{encoder_forward.1} parent=1 // pred_region
      _
    $region57: #{encoder_forward.1} parent=1 // pred_fallthru
      _
    // Predicated region
    $region58: #{encoder_forward.1} parent=1 // pred_check
      _
    $region59: #{encoder_forward.1} parent=1 // pred_check_branch
      %53 = sbr.rel (0) target = $region61
    $region60: #{encoder_forward.1} parent=1 // pred_region
      _
    $region61: #{encoder_forward.1} parent=1 // pred_fallthru
      _
    // Predicated region
    $region62: #{encoder_forward.1} parent=1 // pred_check
      _
    $region63: #{encoder_forward.1} parent=1 // pred_check_branch
      %55 = sbr.rel (0) target = $region65
    $region64: #{encoder_forward.1} parent=1 // pred_region
      _
    $region65: #{encoder_forward.1} parent=1 // pred_fallthru
      _
    // Predicated region
    $region66: #{encoder_forward.1} parent=1 // pred_check
      _
    $region67: #{encoder_forward.1} parent=1 // pred_check_branch
      %57 = sbr.rel (0) target = $region69
    $region68: #{encoder_forward.1} parent=1 // pred_region
      _
    $region69: #{encoder_forward.1} parent=1 // pred_fallthru
      _
    // Predicated region
    $region70: #{encoder_forward.1} parent=1 // pred_check
      _
    $region71: #{encoder_forward.1} parent=1 // pred_check_branch
      %59 = sbr.rel (0) target = $region73
    $region72: #{encoder_forward.1} parent=1 // pred_region
      _
    $region73: #{encoder_forward.1} parent=1 // pred_fallthru
      _
    %v60 = vld [vmem:[%s0] sm:$0xff]
    %v61 = vld [vmem:[%s0 + $0x8] sm:$0xff]
    %v62 = vlaneseq
    %v63 = vand.u32 %v62, 127
    %64 = vset.pattern.permute.xlu0 0
    %65 = vperm.xlu0 %64, %v60
    %v66 = vpop.permute.xlu0 %65
    %67 = vset.pattern.permute.xlu0 0
    %68 = vperm.xlu0 %67, %v61
    %v69 = vpop.permute.xlu0 %68
    %vm70 = vcmp.eq.s32.totalorder %v66, %v63
    %vm71 = vcmp.eq.s32.totalorder %v69, %v63
    %v72 = vsel %vm70, 1, 0
    %v73 = vsel %vm71, 1, 0
    %v74 = vcvt.s32.f32 %v72
    %v75 = vcvt.s32.f32 %v73
    %v76 = vld [vmem:[%s3] sm:$0xff]
    %v77 = vld [vmem:[%s3 + $0x8] sm:$0xff]
    %v78 = vld [vmem:[%s3 + $0x10] sm:$0xff]
    %v79 = vld [vmem:[%s3 + $0x18] sm:$0xff]
    %v80 = vld [vmem:[%s3 + $0x20] sm:$0xff]
    %v81 = vld [vmem:[%s3 + $0x28] sm:$0xff]
    %v82 = vld [vmem:[%s3 + $0x30] sm:$0xff]
    %v83 = vld [vmem:[%s3 + $0x38] sm:$0xff]
    %v84 = vld [vmem:[%s1] sm:$0xff]
    %v85 = vld [vmem:[%s1 + $0x8] sm:$0xff]
    %vm86 = vcmask 523264
    %v88 = vsel %vm86, %v74, 0
    %v91 = vsel %vm86, %v75, 0
    %93 = vmatpush.msra.mxu0 0.0
    %94 = vmatpush.msra.mxu0 0.0
    %95 = vmatpush.msra.mxu0 0.0
    %96 = vmatpush.msra.mxu0 0.0
    %97 = vmatpush.msra.mxu0 0.0
    %98 = vmatpush.msra.mxu0 0.0
    %99 = vmatpush.msra.mxu0 0.0
    %100 = vmatpush.msra.mxu0 0.0
    %101 = vmatpush.msra.mxu0 %v83
    %102 = vmatpush.msra.mxu0 %v82
    %103 = vmatpush.msra.mxu0 %v81
    %104 = vmatpush.msra.mxu0 %v80
    %105 = vmatpush.msra.mxu0 %v79
    %106 = vmatpush.msra.mxu0 %v78
    %107 = vmatpush.msra.mxu0 %v77
    %108 = vmatpush.msra.mxu0 %v76
    %109 = vmatmul.f32.gmra.mxu0 %v88
    %v110 = vpop.f32.mrf.mxu0
    %v111 = vadd.f32 %v84, %v110
    %112 = vmatmul.f32.gmra.mxu0 %v91
    %v113 = vpop.f32.mrf.mxu0
    %v114 = vadd.f32 %v85, %v113
    %115 = vdwg.mxu0
    %v116 = vld [vmem:[%s2] sm:$0x1]
    %v117 = vld [vmem:[%s2 + $0x1] sm:$0x1]
    %v118 = vld [vmem:[%s4] sm:$0xff]
    %v119 = vld [vmem:[%s4 + $0x8] sm:$0xff]
    %v120 = vld [vmem:[%s4 + $0x10] sm:$0xff]
    %v121 = vld [vmem:[%s4 + $0x18] sm:$0xff]
    %v122 = vld [vmem:[%s5] sm:$0x1]
    %v124 = vperm.slane %v122, 0
    %vm126 = vcmask 261120
    %v128 = vsel %vm126, %v111, 0
    %v131 = vsel %vm126, %v114, 0
    %133 = vmatpush.msra.mxu0 0.0
    %134 = vmatpush.msra.mxu0 0.0
    %135 = vmatpush.msra.mxu0 0.0
    %136 = vmatpush.msra.mxu0 0.0
    %137 = vmatpush.msra.mxu0 0.0
    %138 = vmatpush.msra.mxu0 0.0
    %139 = vmatpush.msra.mxu0 0.0
    %140 = vmatpush.msra.mxu0 0.0
    %141 = vmatpush.msra.mxu0 0.0
    %142 = vmatpush.msra.mxu0 0.0
    %143 = vmatpush.msra.mxu0 0.0
    %144 = vmatpush.msra.mxu0 0.0
    %145 = vmatpush.msra.mxu0 %v121
    %146 = vmatpush.msra.mxu0 %v120
    %147 = vmatpush.msra.mxu0 %v119
    %148 = vmatpush.msra.mxu0 %v118
    %149 = vmatmul.f32.gmra.mxu0 %v128
    %v150 = vpop.f32.mrf.mxu0
    %v151 = vadd.f32 %v124, %v150
    %152 = vmatmul.f32.gmra.mxu0 %v131
    %v153 = vpop.f32.mrf.mxu0
    %v154 = vadd.f32 %v124, %v153
    %155 = vdwg.mxu0
    %v158 = vperm.slane %v116, 0
    %v159 = vperm.slane %v117, 0
    %163 = vrot.lane.b32.xlu0 %v151, 96
    %v164 = vpop.permute.xlu0 %163
    %vm165 = vcmask 64512
    %v166 = vsel %vm165, %v151, 0
    %v168 = vsel %vm165, %v164, 0
    %170 = vmatpush.xpose.msra.mxu0 0.0
    %171 = vmatpush.xpose.msra.mxu0 0.0
    %172 = vmatpush.xpose.msra.mxu0 0.0
    %173 = vmatpush.xpose.msra.mxu0 0.0
    %174 = vmatpush.xpose.msra.mxu0 0.0
    %175 = vmatpush.xpose.msra.mxu0 0.0
    %176 = vmatpush.xpose.msra.mxu0 0.0
    %177 = vmatpush.xpose.msra.mxu0 0.0
    %178 = vmatpush.xpose.msra.mxu0 0.0
    %179 = vmatpush.xpose.msra.mxu0 0.0
    %180 = vmatpush.xpose.msra.mxu0 0.0
    %181 = vmatpush.xpose.msra.mxu0 0.0
    %182 = vmatpush.xpose.msra.mxu0 0.0
    %183 = vmatpush.xpose.msra.mxu0 0.0
    %184 = vmatpush.xpose.msra.mxu0 0.0
    %185 = vmatpush.xpose.msra.mxu0 %v168
    %186 = vmatmul.f32.gmra.mxu0 %v166
    %v187 = vpop.f32.mrf.mxu0
    %v188 = vadd.f32 %v158, %v187
    %189 = vdwg.mxu0
    %191 = vrot.lane.b32.xlu0 %v154, 96
    %v192 = vpop.permute.xlu0 %191
    %v193 = vsel %vm165, %v154, 0
    %v195 = vsel %vm165, %v192, 0
    %197 = vmatpush.xpose.msra.mxu0 0.0
    %198 = vmatpush.xpose.msra.mxu0 0.0
    %199 = vmatpush.xpose.msra.mxu0 0.0
    %200 = vmatpush.xpose.msra.mxu0 0.0
    %201 = vmatpush.xpose.msra.mxu0 0.0
    %202 = vmatpush.xpose.msra.mxu0 0.0
    %203 = vmatpush.xpose.msra.mxu0 0.0
    %204 = vmatpush.xpose.msra.mxu0 0.0
    %205 = vmatpush.xpose.msra.mxu0 0.0
    %206 = vmatpush.xpose.msra.mxu0 0.0
    %207 = vmatpush.xpose.msra.mxu0 0.0
    %208 = vmatpush.xpose.msra.mxu0 0.0
    %209 = vmatpush.xpose.msra.mxu0 0.0
    %210 = vmatpush.xpose.msra.mxu0 0.0
    %211 = vmatpush.xpose.msra.mxu0 0.0
    %212 = vmatpush.xpose.msra.mxu0 %v195
    %213 = vmatmul.f32.gmra.mxu0 %v193
    %v214 = vpop.f32.mrf.mxu0
    %v215 = vadd.f32 %v159, %v214
    %216 = vdwg.mxu0
    %v217 = vmul.f32 %v188, 0.17677669
    %v218 = vmul.f32 %v215, 0.17677669
    %v219 = vsel %vm165, %v217, -inf
    %220 = vmax.xlane.f32.xlu0 %v219
    %v221 = vpop.xlane.xlu0 %220
    %v222 = vsel %vm165, %v218, -inf
    %223 = vmax.xlane.f32.xlu0 %v222
    %v224 = vpop.xlane.xlu0 %223
    %v225 = vsub.f32 %v217, %v221
    %v226 = vsub.f32 %v218, %v224
    %v227 = vmul.f32 %v225, 1.442695
    %v228 = vpow.pop %v227
    %v229 = vmul.f32 %v226, 1.442695
    %v230 = vpow.pop %v229
    %v231 = vsel %vm165, %v228, 0.0
    %232 = vadd.xlane.f32.xlu0 %v231
    %v233 = vpop.xlane.xlu0 %232
    %v234 = vsel %vm165, %v230, 0.0
    %235 = vadd.xlane.f32.xlu0 %v234
    %v236 = vpop.xlane.xlu0 %235
    %v237 = vrcp.pop %v233
    %v238 = vmul.f32 %v233, %v237
    %v239 = vsub.f32 1.0, %v238
    %v240 = vmul.f32 %v237, %v239
    %v241 = vadd.f32 %v237, %v240
    %vm242 = vweird.f32 %v233
    %vm243 = vweird.f32 %v237
    %vm244 = vmor %vm242, %vm243
    %v245 = vsel %vm244, %v237, %v241
    %v246 = vand.u32 2147483647, %v233
    %vm247 = vcmp.eq.f32.partialorder %v246, 8.507059e+37
    %v248 = vand.u32 %v233, 2147483648
    %v249 = vor.u32 1.1754944e-38, %v248
    %v250 = vsel %vm247, %v249, %v245
    %v251 = vmul.f32 %v228, %v250
    %v252 = vrcp.pop %v236
    %v253 = vmul.f32 %v236, %v252
    %v254 = vsub.f32 1.0, %v253
    %v255 = vmul.f32 %v252, %v254
    %v256 = vadd.f32 %v252, %v255
    %vm257 = vweird.f32 %v236
    %vm258 = vweird.f32 %v252
    %vm259 = vmor %vm257, %vm258
    %v260 = vsel %vm259, %v252, %v256
    %v261 = vand.u32 2147483647, %v236
    %vm262 = vcmp.eq.f32.partialorder %v261, 8.507059e+37
    %v263 = vand.u32 %v236, 2147483648
    %v264 = vor.u32 1.1754944e-38, %v263
    %v265 = vsel %vm262, %v264, %v260
    %v266 = vmul.f32 %v230, %v265
    %267 = vrot.lane.b32.xlu0 %v151, 64
    %v268 = vpop.permute.xlu0 %267
    %v271 = vsel %vm165, %v251, 0
    %273 = vmatpush.msra.mxu0 0.0
    %274 = vmatpush.msra.mxu0 0.0
    %275 = vmatpush.msra.mxu0 0.0
    %276 = vmatpush.msra.mxu0 0.0
    %277 = vmatpush.msra.mxu0 0.0
    %278 = vmatpush.msra.mxu0 0.0
    %279 = vmatpush.msra.mxu0 0.0
    %280 = vmatpush.msra.mxu0 0.0
    %281 = vmatpush.msra.mxu0 0.0
    %282 = vmatpush.msra.mxu0 0.0
    %283 = vmatpush.msra.mxu0 0.0
    %284 = vmatpush.msra.mxu0 0.0
    %285 = vmatpush.msra.mxu0 0.0
    %286 = vmatpush.msra.mxu0 0.0
    %287 = vmatpush.msra.mxu0 0.0
    %288 = vmatpush.msra.mxu0 %v268
    %289 = vmatmul.f32.gmra.mxu0 %v271
    %v290 = vpop.f32.mrf.mxu0
    %v291 = vadd.f32 0.0, %v290
    %292 = vdwg.mxu0
    %293 = vrot.lane.b32.xlu0 %v154, 64
    %v294 = vpop.permute.xlu0 %293
    %v297 = vsel %vm165, %v266, 0
    %299 = vmatpush.msra.mxu0 0.0
    %300 = vmatpush.msra.mxu0 0.0
    %301 = vmatpush.msra.mxu0 0.0
    %302 = vmatpush.msra.mxu0 0.0
    %303 = vmatpush.msra.mxu0 0.0
    %304 = vmatpush.msra.mxu0 0.0
    %305 = vmatpush.msra.mxu0 0.0
    %306 = vmatpush.msra.mxu0 0.0
    %307 = vmatpush.msra.mxu0 0.0
    %308 = vmatpush.msra.mxu0 0.0
    %309 = vmatpush.msra.mxu0 0.0
    %310 = vmatpush.msra.mxu0 0.0
    %311 = vmatpush.msra.mxu0 0.0
    %312 = vmatpush.msra.mxu0 0.0
    %313 = vmatpush.msra.mxu0 0.0
    %314 = vmatpush.msra.mxu0 %v294
    %315 = vmatmul.f32.gmra.mxu0 %v297
    %v316 = vpop.f32.mrf.mxu0
    %v317 = vadd.f32 0.0, %v316
    %318 = vdwg.mxu0
    %319 = vrot.lane.b32.xlu0 %v151, 120
    %v320 = vpop.permute.xlu0 %319
    %321 = vrot.lane.b32.xlu0 %v151, 88
    %v322 = vpop.permute.xlu0 %321
    %v323 = vsel %vm165, %v320, 0
    %v325 = vsel %vm165, %v322, 0
    %327 = vmatpush.xpose.msra.mxu0 0.0
    %328 = vmatpush.xpose.msra.mxu0 0.0
    %329 = vmatpush.xpose.msra.mxu0 0.0
    %330 = vmatpush.xpose.msra.mxu0 0.0
    %331 = vmatpush.xpose.msra.mxu0 0.0
    %332 = vmatpush.xpose.msra.mxu0 0.0
    %333 = vmatpush.xpose.msra.mxu0 0.0
    %334 = vmatpush.xpose.msra.mxu0 0.0
    %335 = vmatpush.xpose.msra.mxu0 0.0
    %336 = vmatpush.xpose.msra.mxu0 0.0
    %337 = vmatpush.xpose.msra.mxu0 0.0
    %338 = vmatpush.xpose.msra.mxu0 0.0
    %339 = vmatpush.xpose.msra.mxu0 0.0
    %340 = vmatpush.xpose.msra.mxu0 0.0
    %341 = vmatpush.xpose.msra.mxu0 0.0
    %342 = vmatpush.xpose.msra.mxu0 %v325
    %343 = vmatmul.f32.gmra.mxu0 %v323
    %v344 = vpop.f32.mrf.mxu0
    %v345 = vadd.f32 %v158, %v344
    %346 = vdwg.mxu0
    %347 = vrot.lane.b32.xlu0 %v154, 120
    %v348 = vpop.permute.xlu0 %347
    %349 = vrot.lane.b32.xlu0 %v154, 88
    %v350 = vpop.permute.xlu0 %349
    %v351 = vsel %vm165, %v348, 0
    %v353 = vsel %vm165, %v350, 0
    %355 = vmatpush.xpose.msra.mxu0 0.0
    %356 = vmatpush.xpose.msra.mxu0 0.0
    %357 = vmatpush.xpose.msra.mxu0 0.0
    %358 = vmatpush.xpose.msra.mxu0 0.0
    %359 = vmatpush.xpose.msra.mxu0 0.0
    %360 = vmatpush.xpose.msra.mxu0 0.0
    %361 = vmatpush.xpose.msra.mxu0 0.0
    %362 = vmatpush.xpose.msra.mxu0 0.0
    %363 = vmatpush.xpose.msra.mxu0 0.0
    %364 = vmatpush.xpose.msra.mxu0 0.0
    %365 = vmatpush.xpose.msra.mxu0 0.0
    %366 = vmatpush.xpose.msra.mxu0 0.0
    %367 = vmatpush.xpose.msra.mxu0 0.0
    %368 = vmatpush.xpose.msra.mxu0 0.0
    %369 = vmatpush.xpose.msra.mxu0 0.0
    %370 = vmatpush.xpose.msra.mxu0 %v353
    %371 = vmatmul.f32.gmra.mxu0 %v351
    %v372 = vpop.f32.mrf.mxu0
    %v373 = vadd.f32 %v159, %v372
    %374 = vdwg.mxu0
    %v375 = vmul.f32 %v345, 0.17677669
    %v376 = vmul.f32 %v373, 0.17677669
    %v377 = vsel %vm165, %v375, -inf
    %378 = vmax.xlane.f32.xlu0 %v377
    %v379 = vpop.xlane.xlu0 %378
    %v380 = vsel %vm165, %v376, -inf
    %381 = vmax.xlane.f32.xlu0 %v380
    %v382 = vpop.xlane.xlu0 %381
    %v383 = vsub.f32 %v375, %v379
    %v384 = vsub.f32 %v376, %v382
    %v385 = vmul.f32 %v383, 1.442695
    %v386 = vpow.pop %v385
    %v387 = vmul.f32 %v384, 1.442695
    %v388 = vpow.pop %v387
    %v389 = vsel %vm165, %v386, 0.0
    %390 = vadd.xlane.f32.xlu0 %v389
    %v391 = vpop.xlane.xlu0 %390
    %v392 = vsel %vm165, %v388, 0.0
    %393 = vadd.xlane.f32.xlu0 %v392
    %v394 = vpop.xlane.xlu0 %393
    %v395 = vrcp.pop %v391
    %v396 = vmul.f32 %v391, %v395
    %v397 = vsub.f32 1.0, %v396
    %v398 = vmul.f32 %v395, %v397
    %v399 = vadd.f32 %v395, %v398
    %vm400 = vweird.f32 %v391
    %vm401 = vweird.f32 %v395
    %vm402 = vmor %vm400, %vm401
    %v403 = vsel %vm402, %v395, %v399
    %v404 = vand.u32 2147483647, %v391
    %vm405 = vcmp.eq.f32.partialorder %v404, 8.507059e+37
    %v406 = vand.u32 %v391, 2147483648
    %v407 = vor.u32 1.1754944e-38, %v406
    %v408 = vsel %vm405, %v407, %v403
    %v409 = vmul.f32 %v386, %v408
    %v410 = vrcp.pop %v394
    %v411 = vmul.f32 %v394, %v410
    %v412 = vsub.f32 1.0, %v411
    %v413 = vmul.f32 %v410, %v412
    %v414 = vadd.f32 %v410, %v413
    %vm415 = vweird.f32 %v394
    %vm416 = vweird.f32 %v410
    %vm417 = vmor %vm415, %vm416
    %v418 = vsel %vm417, %v410, %v414
    %v419 = vand.u32 2147483647, %v394
    %vm420 = vcmp.eq.f32.partialorder %v419, 8.507059e+37
    %v421 = vand.u32 %v394, 2147483648
    %v422 = vor.u32 1.1754944e-38, %v421
    %v423 = vsel %vm420, %v422, %v418
    %v424 = vmul.f32 %v388, %v423
    %425 = vrot.lane.b32.xlu0 %v151, 56
    %v426 = vpop.permute.xlu0 %425
    %v429 = vsel %vm165, %v409, 0
    %431 = vmatpush.msra.mxu0 0.0
    %432 = vmatpush.msra.mxu0 0.0
    %433 = vmatpush.msra.mxu0 0.0
    %434 = vmatpush.msra.mxu0 0.0
    %435 = vmatpush.msra.mxu0 0.0
    %436 = vmatpush.msra.mxu0 0.0
    %437 = vmatpush.msra.mxu0 0.0
    %438 = vmatpush.msra.mxu0 0.0
    %439 = vmatpush.msra.mxu0 0.0
    %440 = vmatpush.msra.mxu0 0.0
    %441 = vmatpush.msra.mxu0 0.0
    %442 = vmatpush.msra.mxu0 0.0
    %443 = vmatpush.msra.mxu0 0.0
    %444 = vmatpush.msra.mxu0 0.0
    %445 = vmatpush.msra.mxu0 0.0
    %446 = vmatpush.msra.mxu0 %v426
    %447 = vmatmul.f32.gmra.mxu0 %v429
    %v448 = vpop.f32.mrf.mxu0
    %v449 = vadd.f32 0.0, %v448
    %450 = vdwg.mxu0
    %451 = vrot.lane.b32.xlu0 %v154, 56
    %v452 = vpop.permute.xlu0 %451
    %v455 = vsel %vm165, %v424, 0
    %457 = vmatpush.msra.mxu0 0.0
    %458 = vmatpush.msra.mxu0 0.0
    %459 = vmatpush.msra.mxu0 0.0
    %460 = vmatpush.msra.mxu0 0.0
    %461 = vmatpush.msra.mxu0 0.0
    %462 = vmatpush.msra.mxu0 0.0
    %463 = vmatpush.msra.mxu0 0.0
    %464 = vmatpush.msra.mxu0 0.0
    %465 = vmatpush.msra.mxu0 0.0
    %466 = vmatpush.msra.mxu0 0.0
    %467 = vmatpush.msra.mxu0 0.0
    %468 = vmatpush.msra.mxu0 0.0
    %469 = vmatpush.msra.mxu0 0.0
    %470 = vmatpush.msra.mxu0 0.0
    %471 = vmatpush.msra.mxu0 0.0
    %472 = vmatpush.msra.mxu0 %v452
    %473 = vmatmul.f32.gmra.mxu0 %v455
    %v474 = vpop.f32.mrf.mxu0
    %v475 = vadd.f32 0.0, %v474
    %476 = vdwg.mxu0
    %477 = vrot.lane.b32.xlu0 %v151, 112
    %v478 = vpop.permute.xlu0 %477
    %479 = vrot.lane.b32.xlu0 %v151, 80
    %v480 = vpop.permute.xlu0 %479
    %v481 = vsel %vm165, %v478, 0
    %v483 = vsel %vm165, %v480, 0
    %485 = vmatpush.xpose.msra.mxu0 0.0
    %486 = vmatpush.xpose.msra.mxu0 0.0
    %487 = vmatpush.xpose.msra.mxu0 0.0
    %488 = vmatpush.xpose.msra.mxu0 0.0
    %489 = vmatpush.xpose.msra.mxu0 0.0
    %490 = vmatpush.xpose.msra.mxu0 0.0
    %491 = vmatpush.xpose.msra.mxu0 0.0
    %492 = vmatpush.xpose.msra.mxu0 0.0
    %493 = vmatpush.xpose.msra.mxu0 0.0
    %494 = vmatpush.xpose.msra.mxu0 0.0
    %495 = vmatpush.xpose.msra.mxu0 0.0
    %496 = vmatpush.xpose.msra.mxu0 0.0
    %497 = vmatpush.xpose.msra.mxu0 0.0
    %498 = vmatpush.xpose.msra.mxu0 0.0
    %499 = vmatpush.xpose.msra.mxu0 0.0
    %500 = vmatpush.xpose.msra.mxu0 %v483
    %501 = vmatmul.f32.gmra.mxu0 %v481
    %v502 = vpop.f32.mrf.mxu0
    %v503 = vadd.f32 %v158, %v502
    %504 = vdwg.mxu0
    %505 = vrot.lane.b32.xlu0 %v154, 112
    %v506 = vpop.permute.xlu0 %505
    %507 = vrot.lane.b32.xlu0 %v154, 80
    %v508 = vpop.permute.xlu0 %507
    %v509 = vsel %vm165, %v506, 0
    %v511 = vsel %vm165, %v508, 0
    %513 = vmatpush.xpose.msra.mxu0 0.0
    %514 = vmatpush.xpose.msra.mxu0 0.0
    %515 = vmatpush.xpose.msra.mxu0 0.0
    %516 = vmatpush.xpose.msra.mxu0 0.0
    %517 = vmatpush.xpose.msra.mxu0 0.0
    %518 = vmatpush.xpose.msra.mxu0 0.0
    %519 = vmatpush.xpose.msra.mxu0 0.0
    %520 = vmatpush.xpose.msra.mxu0 0.0
    %521 = vmatpush.xpose.msra.mxu0 0.0
    %522 = vmatpush.xpose.msra.mxu0 0.0
    %523 = vmatpush.xpose.msra.mxu0 0.0
    %524 = vmatpush.xpose.msra.mxu0 0.0
    %525 = vmatpush.xpose.msra.mxu0 0.0
    %526 = vmatpush.xpose.msra.mxu0 0.0
    %527 = vmatpush.xpose.msra.mxu0 0.0
    %528 = vmatpush.xpose.msra.mxu0 %v511
    %529 = vmatmul.f32.gmra.mxu0 %v509
    %v530 = vpop.f32.mrf.mxu0
    %v531 = vadd.f32 %v159, %v530
    %532 = vdwg.mxu0
    %v533 = vmul.f32 %v503, 0.17677669
    %v534 = vmul.f32 %v531, 0.17677669
    %v535 = vsel %vm165, %v533, -inf
    %536 = vmax.xlane.f32.xlu0 %v535
    %v537 = vpop.xlane.xlu0 %536
    %v538 = vsel %vm165, %v534, -inf
    %539 = vmax.xlane.f32.xlu0 %v538
    %v540 = vpop.xlane.xlu0 %539
    %v541 = vsub.f32 %v533, %v537
    %v542 = vsub.f32 %v534, %v540
    %v543 = vmul.f32 %v541, 1.442695
    %v544 = vpow.pop %v543
    %v545 = vmul.f32 %v542, 1.442695
    %v546 = vpow.pop %v545
    %v547 = vsel %vm165, %v544, 0.0
    %548 = vadd.xlane.f32.xlu0 %v547
    %v549 = vpop.xlane.xlu0 %548
    %v550 = vsel %vm165, %v546, 0.0
    %551 = vadd.xlane.f32.xlu0 %v550
    %v552 = vpop.xlane.xlu0 %551
    %v553 = vrcp.pop %v549
    %v554 = vmul.f32 %v549, %v553
    %v555 = vsub.f32 1.0, %v554
    %v556 = vmul.f32 %v553, %v555
    %v557 = vadd.f32 %v553, %v556
    %vm558 = vweird.f32 %v549
    %vm559 = vweird.f32 %v553
    %vm560 = vmor %vm558, %vm559
    %v561 = vsel %vm560, %v553, %v557
    %v562 = vand.u32 2147483647, %v549
    %vm563 = vcmp.eq.f32.partialorder %v562, 8.507059e+37
    %v564 = vand.u32 %v549, 2147483648
    %v565 = vor.u32 1.1754944e-38, %v564
    %v566 = vsel %vm563, %v565, %v561
    %v567 = vmul.f32 %v544, %v566
    %v568 = vrcp.pop %v552
    %v569 = vmul.f32 %v552, %v568
    %v570 = vsub.f32 1.0, %v569
    %v571 = vmul.f32 %v568, %v570
    %v572 = vadd.f32 %v568, %v571
    %vm573 = vweird.f32 %v552
    %vm574 = vweird.f32 %v568
    %vm575 = vmor %vm573, %vm574
    %v576 = vsel %vm575, %v568, %v572
    %v577 = vand.u32 2147483647, %v552
    %vm578 = vcmp.eq.f32.partialorder %v577, 8.507059e+37
    %v579 = vand.u32 %v552, 2147483648
    %v580 = vor.u32 1.1754944e-38, %v579
    %v581 = vsel %vm578, %v580, %v576
    %v582 = vmul.f32 %v546, %v581
    %583 = vrot.lane.b32.xlu0 %v151, 48
    %v584 = vpop.permute.xlu0 %583
    %v587 = vsel %vm165, %v567, 0
    %589 = vmatpush.msra.mxu0 0.0
    %590 = vmatpush.msra.mxu0 0.0
    %591 = vmatpush.msra.mxu0 0.0
    %592 = vmatpush.msra.mxu0 0.0
    %593 = vmatpush.msra.mxu0 0.0
    %594 = vmatpush.msra.mxu0 0.0
    %595 = vmatpush.msra.mxu0 0.0
    %596 = vmatpush.msra.mxu0 0.0
    %597 = vmatpush.msra.mxu0 0.0
    %598 = vmatpush.msra.mxu0 0.0
    %599 = vmatpush.msra.mxu0 0.0
    %600 = vmatpush.msra.mxu0 0.0
    %601 = vmatpush.msra.mxu0 0.0
    %602 = vmatpush.msra.mxu0 0.0
    %603 = vmatpush.msra.mxu0 0.0
    %604 = vmatpush.msra.mxu0 %v584
    %605 = vmatmul.f32.gmra.mxu0 %v587
    %v606 = vpop.f32.mrf.mxu0
    %v607 = vadd.f32 0.0, %v606
    %608 = vdwg.mxu0
    %609 = vrot.lane.b32.xlu0 %v154, 48
    %v610 = vpop.permute.xlu0 %609
    %v613 = vsel %vm165, %v582, 0
    %615 = vmatpush.msra.mxu0 0.0
    %616 = vmatpush.msra.mxu0 0.0
    %617 = vmatpush.msra.mxu0 0.0
    %618 = vmatpush.msra.mxu0 0.0
    %619 = vmatpush.msra.mxu0 0.0
    %620 = vmatpush.msra.mxu0 0.0
    %621 = vmatpush.msra.mxu0 0.0
    %622 = vmatpush.msra.mxu0 0.0
    %623 = vmatpush.msra.mxu0 0.0
    %624 = vmatpush.msra.mxu0 0.0
    %625 = vmatpush.msra.mxu0 0.0
    %626 = vmatpush.msra.mxu0 0.0
    %627 = vmatpush.msra.mxu0 0.0
    %628 = vmatpush.msra.mxu0 0.0
    %629 = vmatpush.msra.mxu0 0.0
    %630 = vmatpush.msra.mxu0 %v610
    %631 = vmatmul.f32.gmra.mxu0 %v613
    %v632 = vpop.f32.mrf.mxu0
    %v633 = vadd.f32 0.0, %v632
    %634 = vdwg.mxu0
    %635 = vrot.lane.b32.xlu0 %v151, 104
    %v636 = vpop.permute.xlu0 %635
    %637 = vrot.lane.b32.xlu0 %v151, 72
    %v638 = vpop.permute.xlu0 %637
    %v639 = vsel %vm165, %v636, 0
    %v641 = vsel %vm165, %v638, 0
    %643 = vmatpush.xpose.msra.mxu0 0.0
    %644 = vmatpush.xpose.msra.mxu0 0.0
    %645 = vmatpush.xpose.msra.mxu0 0.0
    %646 = vmatpush.xpose.msra.mxu0 0.0
    %647 = vmatpush.xpose.msra.mxu0 0.0
    %648 = vmatpush.xpose.msra.mxu0 0.0
    %649 = vmatpush.xpose.msra.mxu0 0.0
    %650 = vmatpush.xpose.msra.mxu0 0.0
    %651 = vmatpush.xpose.msra.mxu0 0.0
    %652 = vmatpush.xpose.msra.mxu0 0.0
    %653 = vmatpush.xpose.msra.mxu0 0.0
    %654 = vmatpush.xpose.msra.mxu0 0.0
    %655 = vmatpush.xpose.msra.mxu0 0.0
    %656 = vmatpush.xpose.msra.mxu0 0.0
    %657 = vmatpush.xpose.msra.mxu0 0.0
    %658 = vmatpush.xpose.msra.mxu0 %v641
    %659 = vmatmul.f32.gmra.mxu0 %v639
    %v660 = vpop.f32.mrf.mxu0
    %v661 = vadd.f32 %v158, %v660
    %662 = vdwg.mxu0
    %663 = vrot.lane.b32.xlu0 %v154, 104
    %v664 = vpop.permute.xlu0 %663
    %665 = vrot.lane.b32.xlu0 %v154, 72
    %v666 = vpop.permute.xlu0 %665
    %v667 = vsel %vm165, %v664, 0
    %v669 = vsel %vm165, %v666, 0
    %671 = vmatpush.xpose.msra.mxu0 0.0
    %672 = vmatpush.xpose.msra.mxu0 0.0
    %673 = vmatpush.xpose.msra.mxu0 0.0
    %674 = vmatpush.xpose.msra.mxu0 0.0
    %675 = vmatpush.xpose.msra.mxu0 0.0
    %676 = vmatpush.xpose.msra.mxu0 0.0
    %677 = vmatpush.xpose.msra.mxu0 0.0
    %678 = vmatpush.xpose.msra.mxu0 0.0
    %679 = vmatpush.xpose.msra.mxu0 0.0
    %680 = vmatpush.xpose.msra.mxu0 0.0
    %681 = vmatpush.xpose.msra.mxu0 0.0
    %682 = vmatpush.xpose.msra.mxu0 0.0
    %683 = vmatpush.xpose.msra.mxu0 0.0
    %684 = vmatpush.xpose.msra.mxu0 0.0
    %685 = vmatpush.xpose.msra.mxu0 0.0
    %686 = vmatpush.xpose.msra.mxu0 %v669
    %687 = vmatmul.f32.gmra.mxu0 %v667
    %v688 = vpop.f32.mrf.mxu0
    %v689 = vadd.f32 %v159, %v688
    %690 = vdwg.mxu0
    %v691 = vmul.f32 %v661, 0.17677669
    %v692 = vmul.f32 %v689, 0.17677669
    %v693 = vsel %vm165, %v691, -inf
    %694 = vmax.xlane.f32.xlu0 %v693
    %v695 = vpop.xlane.xlu0 %694
    %v696 = vsel %vm165, %v692, -inf
    %697 = vmax.xlane.f32.xlu0 %v696
    %v698 = vpop.xlane.xlu0 %697
    %v699 = vsub.f32 %v691, %v695
    %v700 = vsub.f32 %v692, %v698
    %v701 = vmul.f32 %v699, 1.442695
    %v702 = vpow.pop %v701
    %v703 = vmul.f32 %v700, 1.442695
    %v704 = vpow.pop %v703
    %v705 = vsel %vm165, %v702, 0.0
    %706 = vadd.xlane.f32.xlu0 %v705
    %v707 = vpop.xlane.xlu0 %706
    %v708 = vsel %vm165, %v704, 0.0
    %709 = vadd.xlane.f32.xlu0 %v708
    %v710 = vpop.xlane.xlu0 %709
    %v711 = vrcp.pop %v707
    %v712 = vmul.f32 %v707, %v711
    %v713 = vsub.f32 1.0, %v712
    %v714 = vmul.f32 %v711, %v713
    %v715 = vadd.f32 %v711, %v714
    %vm716 = vweird.f32 %v707
    %vm717 = vweird.f32 %v711
    %vm718 = vmor %vm716, %vm717
    %v719 = vsel %vm718, %v711, %v715
    %v720 = vand.u32 2147483647, %v707
    %vm721 = vcmp.eq.f32.partialorder %v720, 8.507059e+37
    %v722 = vand.u32 %v707, 2147483648
    %v723 = vor.u32 1.1754944e-38, %v722
    %v724 = vsel %vm721, %v723, %v719
    %v725 = vmul.f32 %v702, %v724
    %v726 = vrcp.pop %v710
    %v727 = vmul.f32 %v710, %v726
    %v728 = vsub.f32 1.0, %v727
    %v729 = vmul.f32 %v726, %v728
    %v730 = vadd.f32 %v726, %v729
    %vm731 = vweird.f32 %v710
    %vm732 = vweird.f32 %v726
    %vm733 = vmor %vm731, %vm732
    %v734 = vsel %vm733, %v726, %v730
    %v735 = vand.u32 2147483647, %v710
    %vm736 = vcmp.eq.f32.partialorder %v735, 8.507059e+37
    %v737 = vand.u32 %v710, 2147483648
    %v738 = vor.u32 1.1754944e-38, %v737
    %v739 = vsel %vm736, %v738, %v734
    %v740 = vmul.f32 %v704, %v739
    %741 = vrot.lane.b32.xlu0 %v151, 40
    %v742 = vpop.permute.xlu0 %741
    %v745 = vsel %vm165, %v725, 0
    %747 = vmatpush.msra.mxu0 0.0
    %748 = vmatpush.msra.mxu0 0.0
    %749 = vmatpush.msra.mxu0 0.0
    %750 = vmatpush.msra.mxu0 0.0
    %751 = vmatpush.msra.mxu0 0.0
    %752 = vmatpush.msra.mxu0 0.0
    %753 = vmatpush.msra.mxu0 0.0
    %754 = vmatpush.msra.mxu0 0.0
    %755 = vmatpush.msra.mxu0 0.0
    %756 = vmatpush.msra.mxu0 0.0
    %757 = vmatpush.msra.mxu0 0.0
    %758 = vmatpush.msra.mxu0 0.0
    %759 = vmatpush.msra.mxu0 0.0
    %760 = vmatpush.msra.mxu0 0.0
    %761 = vmatpush.msra.mxu0 0.0
    %762 = vmatpush.msra.mxu0 %v742
    %763 = vmatmul.f32.gmra.mxu0 %v745
    %v764 = vpop.f32.mrf.mxu0
    %v765 = vadd.f32 0.0, %v764
    %766 = vdwg.mxu0
    %767 = vrot.lane.b32.xlu0 %v154, 40
    %v768 = vpop.permute.xlu0 %767
    %v771 = vsel %vm165, %v740, 0
    %773 = vmatpush.msra.mxu0 0.0
    %774 = vmatpush.msra.mxu0 0.0
    %775 = vmatpush.msra.mxu0 0.0
    %776 = vmatpush.msra.mxu0 0.0
    %777 = vmatpush.msra.mxu0 0.0
    %778 = vmatpush.msra.mxu0 0.0
    %779 = vmatpush.msra.mxu0 0.0
    %780 = vmatpush.msra.mxu0 0.0
    %781 = vmatpush.msra.mxu0 0.0
    %782 = vmatpush.msra.mxu0 0.0
    %783 = vmatpush.msra.mxu0 0.0
    %784 = vmatpush.msra.mxu0 0.0
    %785 = vmatpush.msra.mxu0 0.0
    %786 = vmatpush.msra.mxu0 0.0
    %787 = vmatpush.msra.mxu0 0.0
    %788 = vmatpush.msra.mxu0 %v768
    %789 = vmatmul.f32.gmra.mxu0 %v771
    %v790 = vpop.f32.mrf.mxu0
    %v791 = vadd.f32 0.0, %v790
    %792 = vdwg.mxu0
    %795 = vrot.lane.b32.xlu0 %v449, 8
    %v796 = vpop.permute.xlu0 %795
    %797 = vrot.lane.b32.xlu0 %v475, 8
    %v798 = vpop.permute.xlu0 %797
    %803 = vrot.lane.b32.xlu0 %v607, 16
    %v804 = vpop.permute.xlu0 %803
    %805 = vrot.lane.b32.xlu0 %v633, 16
    %v806 = vpop.permute.xlu0 %805
    %811 = vrot.lane.b32.xlu0 %v765, 24
    %v812 = vpop.permute.xlu0 %811
    %813 = vrot.lane.b32.xlu0 %v791, 24
    %v814 = vpop.permute.xlu0 %813
    %v817 = vsel %vm165, %v291, %v796
    %v818 = vsel %vm165, %v317, %v798
    %vm819 = vcmask 130048
    %v820 = vsel %vm819, %v817, %v804
    %v821 = vsel %vm819, %v818, %v806
    %vm822 = vcmask 195584
    %v823 = vsel %vm822, %v820, %v812
    %v824 = vsel %vm822, %v821, %v814
    %v825 = vld [vmem:[%s6] sm:$0xff]
    %v826 = vld [vmem:[%s6 + $0x8] sm:$0xff]
    %v827 = vld [vmem:[%s6 + $0x10] sm:$0xff]
    %v828 = vld [vmem:[%s6 + $0x18] sm:$0xff]
    %v829 = vld [vmem:[%s7] sm:$0x1]
    %v831 = vperm.slane %v829, 0
    %v834 = vsel %vm126, %v823, 0
    %v837 = vsel %vm126, %v824, 0
    %839 = vmatpush.msra.mxu0 0.0
    %840 = vmatpush.msra.mxu0 0.0
    %841 = vmatpush.msra.mxu0 0.0
    %842 = vmatpush.msra.mxu0 0.0
    %843 = vmatpush.msra.mxu0 0.0
    %844 = vmatpush.msra.mxu0 0.0
    %845 = vmatpush.msra.mxu0 0.0
    %846 = vmatpush.msra.mxu0 0.0
    %847 = vmatpush.msra.mxu0 0.0
    %848 = vmatpush.msra.mxu0 0.0
    %849 = vmatpush.msra.mxu0 0.0
    %850 = vmatpush.msra.mxu0 0.0
    %851 = vmatpush.msra.mxu0 %v828
    %852 = vmatpush.msra.mxu0 %v827
    %853 = vmatpush.msra.mxu0 %v826
    %854 = vmatpush.msra.mxu0 %v825
    %855 = vmatmul.f32.gmra.mxu0 %v834
    %v856 = vpop.f32.mrf.mxu0
    %v857 = vadd.f32 %v831, %v856
    %858 = vmatmul.f32.gmra.mxu0 %v837
    %v859 = vpop.f32.mrf.mxu0
    %v860 = vadd.f32 %v831, %v859
    %861 = vdwg.mxu0
    %v862 = vadd.f32 %v857, %v111
    %v863 = vadd.f32 %v860, %v114
    %v864 = vld [vmem:[%s8] sm:$0x1]
    %v865 = vld [vmem:[%s9] sm:$0x1]
    %v866 = vsel %vm126, %v862, 0.0
    %867 = vadd.xlane.f32.xlu0 %v866
    %v868 = vpop.xlane.xlu0 %867
    %v869 = vsel %vm126, %v863, 0.0
    %870 = vadd.xlane.f32.xlu0 %v869
    %v871 = vpop.xlane.xlu0 %870
    %v872 = vrcp.pop 32.0
    %v873 = vmul.f32 32.0, %v872
    %v874 = vsub.f32 1.0, %v873
    %v875 = vmul.f32 %v872, %v874
    %v876 = vadd.f32 %v872, %v875
    %vm877 = vweird.f32 %v872
    %v878 = vsel %vm877, %v872, %v876
    %v879 = vmul.f32 %v868, %v878
    %v880 = vmul.f32 %v871, %v878
    %v881 = vsub.f32 %v862, %v879
    %v882 = vsub.f32 %v863, %v880
    %v883 = vmul.f32 %v881, %v881
    %v884 = vmul.f32 %v882, %v882
    %v885 = vsel %vm126, %v883, 0.0
    %886 = vadd.xlane.f32.xlu0 %v885
    %v887 = vpop.xlane.xlu0 %886
    %v888 = vsel %vm126, %v884, 0.0
    %889 = vadd.xlane.f32.xlu0 %v888
    %v890 = vpop.xlane.xlu0 %889
    %v891 = vmul.f32 %v887, %v878
    %v892 = vmul.f32 %v890, %v878
    %v893 = vadd.f32 %v891, 1e-06
    %v894 = vadd.f32 %v892, 1e-06
    %v895 = vrsqrt.pop %v893
    %v896 = vmul.f32 %v895, %v893
    %v897 = vmul.f32 %v896, %v895
    %v898 = vmul.f32 0.5, %v897
    %v899 = vsub.f32 1.5, %v898
    %v900 = vmul.f32 %v895, %v899
    %vm901 = vweird.f32 %v893
    %vm902 = vweird.f32 %v895
    %vm903 = vmor %vm901, %vm902
    %v904 = vsel %vm903, %v895, %v900
    %v905 = vrsqrt.pop %v894
    %v906 = vmul.f32 %v905, %v894
    %v907 = vmul.f32 %v906, %v905
    %v908 = vmul.f32 0.5, %v907
    %v909 = vsub.f32 1.5, %v908
    %v910 = vmul.f32 %v905, %v909
    %vm911 = vweird.f32 %v894
    %vm912 = vweird.f32 %v905
    %vm913 = vmor %vm911, %vm912
    %v914 = vsel %vm913, %v905, %v910
    %v915 = vmul.f32 %v881, %v904
    %v916 = vmul.f32 %v882, %v914
    %v918 = vperm.slane %v864, 0
    %v920 = vmul.f32 %v915, %v918
    %v921 = vmul.f32 %v916, %v918
    %v923 = vperm.slane %v865, 0
    %v925 = vadd.f32 %v920, %v923
    %v926 = vadd.f32 %v921, %v923
    %v927 = vld [vmem:[%s10] sm:$0xff]
    %v928 = vld [vmem:[%s10 + $0x8] sm:$0xff]
    %v929 = vld [vmem:[%s10 + $0x10] sm:$0xff]
    %v930 = vld [vmem:[%s10 + $0x18] sm:$0xff]
    %v931 = vld [vmem:[%s11] sm:$0x1]
    %v933 = vperm.slane %v931, 0
    %v936 = vsel %vm126, %v925, 0
    %v939 = vsel %vm126, %v926, 0
    %941 = vmatpush.msra.mxu0 0.0
    %942 = vmatpush.msra.mxu0 0.0
    %943 = vmatpush.msra.mxu0 0.0
    %944 = vmatpush.msra.mxu0 0.0
    %945 = vmatpush.msra.mxu0 0.0
    %946 = vmatpush.msra.mxu0 0.0
    %947 = vmatpush.msra.mxu0 0.0
    %948 = vmatpush.msra.mxu0 0.0
    %949 = vmatpush.msra.mxu0 0.0
    %950 = vmatpush.msra.mxu0 0.0
    %951 = vmatpush.msra.mxu0 0.0
    %952 = vmatpush.msra.mxu0 0.0
    %953 = vmatpush.msra.mxu0 %v930
    %954 = vmatpush.msra.mxu0 %v929
    %955 = vmatpush.msra.mxu0 %v928
    %956 = vmatpush.msra.mxu0 %v927
    %957 = vmatmul.f32.gmra.mxu0 %v936
    %v958 = vpop.f32.mrf.mxu0
    %v959 = vadd.f32 %v933, %v958
    %960 = vmatmul.f32.gmra.mxu0 %v939
    %v961 = vpop.f32.mrf.mxu0
    %v962 = vadd.f32 %v933, %v961
    %963 = vdwg.mxu0
    %v964 = vmax.f32 %v959, 0.0
    %v965 = vmax.f32 %v962, 0.0
    %v966 = vld [vmem:[%s12] sm:$0xff]
    %v967 = vld [vmem:[%s12 + $0x8] sm:$0xff]
    %v968 = vld [vmem:[%s12 + $0x10] sm:$0xff]
    %v969 = vld [vmem:[%s12 + $0x18] sm:$0xff]
    %v970 = vld [vmem:[%s12 + $0x20] sm:$0xff]
    %v971 = vld [vmem:[%s12 + $0x28] sm:$0xff]
    %v972 = vld [vmem:[%s12 + $0x30] sm:$0xff]
    %v973 = vld [vmem:[%s12 + $0x38] sm:$0xff]
    %v974 = vld [vmem:[%s13] sm:$0x1]
    %v976 = vperm.slane %v974, 0
    %v979 = vsel %vm86, %v964, 0
    %v982 = vsel %vm86, %v965, 0
    %984 = vmatpush.msra.mxu0 0.0
    %985 = vmatpush.msra.mxu0 0.0
    %986 = vmatpush.msra.mxu0 0.0
    %987 = vmatpush.msra.mxu0 0.0
    %988 = vmatpush.msra.mxu0 0.0
    %989 = vmatpush.msra.mxu0 0.0
    %990 = vmatpush.msra.mxu0 0.0
    %991 = vmatpush.msra.mxu0 0.0
    %992 = vmatpush.msra.mxu0 %v973
    %993 = vmatpush.msra.mxu0 %v972
    %994 = vmatpush.msra.mxu0 %v971
    %995 = vmatpush.msra.mxu0 %v970
    %996 = vmatpush.msra.mxu0 %v969
    %997 = vmatpush.msra.mxu0 %v968
    %998 = vmatpush.msra.mxu0 %v967
    %999 = vmatpush.msra.mxu0 %v966
    %1000 = vmatmul.f32.gmra.mxu0 %v979
    %v1001 = vpop.f32.mrf.mxu0
    %v1002 = vadd.f32 %v976, %v1001
    %1003 = vmatmul.f32.gmra.mxu0 %v982
    %v1004 = vpop.f32.mrf.mxu0
    %v1005 = vadd.f32 %v976, %v1004
    %1006 = vdwg.mxu0
    %v1007 = vadd.f32 %v1002, %v925
    %v1008 = vadd.f32 %v1005, %v926
    %v1009 = vld [vmem:[%s14] sm:$0x1]
    %v1010 = vld [vmem:[%s15] sm:$0x1]
    %v1011 = vsel %vm126, %v1007, 0.0
    %1012 = vadd.xlane.f32.xlu0 %v1011
    %v1013 = vpop.xlane.xlu0 %1012
    %v1014 = vsel %vm126, %v1008, 0.0
    %1015 = vadd.xlane.f32.xlu0 %v1014
    %v1016 = vpop.xlane.xlu0 %1015
    %v1017 = vmul.f32 %v1013, %v878
    %v1018 = vmul.f32 %v1016, %v878
    %v1019 = vsub.f32 %v1007, %v1017
    %v1020 = vsub.f32 %v1008, %v1018
    %v1021 = vmul.f32 %v1019, %v1019
    %v1022 = vmul.f32 %v1020, %v1020
    %v1023 = vsel %vm126, %v1021, 0.0
    %1024 = vadd.xlane.f32.xlu0 %v1023
    %v1025 = vpop.xlane.xlu0 %1024
    %v1026 = vsel %vm126, %v1022, 0.0
    %1027 = vadd.xlane.f32.xlu0 %v1026
    %v1028 = vpop.xlane.xlu0 %1027
    %v1029 = vmul.f32 %v1025, %v878
    %v1030 = vmul.f32 %v1028, %v878
    %v1031 = vadd.f32 %v1029, 1e-06
    %v1032 = vadd.f32 %v1030, 1e-06
    %v1033 = vrsqrt.pop %v1031
    %v1034 = vmul.f32 %v1033, %v1031
    %v1035 = vmul.f32 %v1034, %v1033
    %v1036 = vmul.f32 0.5, %v1035
    %v1037 = vsub.f32 1.5, %v1036
    %v1038 = vmul.f32 %v1033, %v1037
    %vm1039 = vweird.f32 %v1031
    %vm1040 = vweird.f32 %v1033
    %vm1041 = vmor %vm1039, %vm1040
    %v1042 = vsel %vm1041, %v1033, %v1038
    %v1043 = vrsqrt.pop %v1032
    %v1044 = vmul.f32 %v1043, %v1032
    %v1045 = vmul.f32 %v1044, %v1043
    %v1046 = vmul.f32 0.5, %v1045
    %v1047 = vsub.f32 1.5, %v1046
    %v1048 = vmul.f32 %v1043, %v1047
    %vm1049 = vweird.f32 %v1032
    %vm1050 = vweird.f32 %v1043
    %vm1051 = vmor %vm1049, %vm1050
    %v1052 = vsel %vm1051, %v1043, %v1048
    %v1053 = vmul.f32 %v1019, %v1042
    %v1054 = vmul.f32 %v1020, %v1052
    %v1056 = vperm.slane %v1009, 0
    %v1058 = vmul.f32 %v1053, %v1056
    %v1059 = vmul.f32 %v1054, %v1056
    %v1061 = vperm.slane %v1010, 0
    %v1063 = vadd.f32 %v1058, %v1061
    %v1064 = vadd.f32 %v1059, %v1061
    %s1065 = scalar_lea.vmem %s4, 32
    %v1066 = vld [vmem:[%s1065] sm:$0xff]
    %v1067 = vld [vmem:[%s1065 + $0x8] sm:$0xff]
    %v1068 = vld [vmem:[%s1065 + $0x10] sm:$0xff]
    %v1069 = vld [vmem:[%s1065 + $0x18] sm:$0xff]
    %s1070 = scalar_lea.vmem %s5, 1
    %v1071 = vld [vmem:[%s1070] sm:$0x1]
    %v1073 = vperm.slane %v1071, 0
    %v1076 = vsel %vm126, %v1063, 0
    %v1079 = vsel %vm126, %v1064, 0
    %1081 = vmatpush.msra.mxu0 0.0
    %1082 = vmatpush.msra.mxu0 0.0
    %1083 = vmatpush.msra.mxu0 0.0
    %1084 = vmatpush.msra.mxu0 0.0
    %1085 = vmatpush.msra.mxu0 0.0
    %1086 = vmatpush.msra.mxu0 0.0
    %1087 = vmatpush.msra.mxu0 0.0
    %1088 = vmatpush.msra.mxu0 0.0
    %1089 = vmatpush.msra.mxu0 0.0
    %1090 = vmatpush.msra.mxu0 0.0
    %1091 = vmatpush.msra.mxu0 0.0
    %1092 = vmatpush.msra.mxu0 0.0
    %1093 = vmatpush.msra.mxu0 %v1069
    %1094 = vmatpush.msra.mxu0 %v1068
    %1095 = vmatpush.msra.mxu0 %v1067
    %1096 = vmatpush.msra.mxu0 %v1066
    %1097 = vmatmul.f32.gmra.mxu0 %v1076
    %v1098 = vpop.f32.mrf.mxu0
    %v1099 = vadd.f32 %v1073, %v1098
    %1100 = vmatmul.f32.gmra.mxu0 %v1079
    %v1101 = vpop.f32.mrf.mxu0
    %v1102 = vadd.f32 %v1073, %v1101
    %1103 = vdwg.mxu0
    %1105 = vrot.lane.b32.xlu0 %v1099, 96
    %v1106 = vpop.permute.xlu0 %1105
    %v1107 = vsel %vm165, %v1099, 0
    %v1109 = vsel %vm165, %v1106, 0
    %1111 = vmatpush.xpose.msra.mxu0 0.0
    %1112 = vmatpush.xpose.msra.mxu0 0.0
    %1113 = vmatpush.xpose.msra.mxu0 0.0
    %1114 = vmatpush.xpose.msra.mxu0 0.0
    %1115 = vmatpush.xpose.msra.mxu0 0.0
    %1116 = vmatpush.xpose.msra.mxu0 0.0
    %1117 = vmatpush.xpose.msra.mxu0 0.0
    %1118 = vmatpush.xpose.msra.mxu0 0.0
    %1119 = vmatpush.xpose.msra.mxu0 0.0
    %1120 = vmatpush.xpose.msra.mxu0 0.0
    %1121 = vmatpush.xpose.msra.mxu0 0.0
    %1122 = vmatpush.xpose.msra.mxu0 0.0
    %1123 = vmatpush.xpose.msra.mxu0 0.0
    %1124 = vmatpush.xpose.msra.mxu0 0.0
    %1125 = vmatpush.xpose.msra.mxu0 0.0
    %1126 = vmatpush.xpose.msra.mxu0 %v1109
    %1127 = vmatmul.f32.gmra.mxu0 %v1107
    %v1128 = vpop.f32.mrf.mxu0
    %v1129 = vadd.f32 %v158, %v1128
    %1130 = vdwg.mxu0
    %1132 = vrot.lane.b32.xlu0 %v1102, 96
    %v1133 = vpop.permute.xlu0 %1132
    %v1134 = vsel %vm165, %v1102, 0
    %v1136 = vsel %vm165, %v1133, 0
    %1138 = vmatpush.xpose.msra.mxu0 0.0
    %1139 = vmatpush.xpose.msra.mxu0 0.0
    %1140 = vmatpush.xpose.msra.mxu0 0.0
    %1141 = vmatpush.xpose.msra.mxu0 0.0
    %1142 = vmatpush.xpose.msra.mxu0 0.0
    %1143 = vmatpush.xpose.msra.mxu0 0.0
    %1144 = vmatpush.xpose.msra.mxu0 0.0
    %1145 = vmatpush.xpose.msra.mxu0 0.0
    %1146 = vmatpush.xpose.msra.mxu0 0.0
    %1147 = vmatpush.xpose.msra.mxu0 0.0
    %1148 = vmatpush.xpose.msra.mxu0 0.0
    %1149 = vmatpush.xpose.msra.mxu0 0.0
    %1150 = vmatpush.xpose.msra.mxu0 0.0
    %1151 = vmatpush.xpose.msra.mxu0 0.0
    %1152 = vmatpush.xpose.msra.mxu0 0.0
    %1153 = vmatpush.xpose.msra.mxu0 %v1136
    %1154 = vmatmul.f32.gmra.mxu0 %v1134
    %v1155 = vpop.f32.mrf.mxu0
    %v1156 = vadd.f32 %v159, %v1155
    %1157 = vdwg.mxu0
    %v1158 = vmul.f32 %v1129, 0.17677669
    %v1159 = vmul.f32 %v1156, 0.17677669
    %v1160 = vsel %vm165, %v1158, -inf
    %1161 = vmax.xlane.f32.xlu0 %v1160
    %v1162 = vpop.xlane.xlu0 %1161
    %v1163 = vsel %vm165, %v1159, -inf
    %1164 = vmax.xlane.f32.xlu0 %v1163
    %v1165 = vpop.xlane.xlu0 %1164
    %v1166 = vsub.f32 %v1158, %v1162
    %v1167 = vsub.f32 %v1159, %v1165
    %v1168 = vmul.f32 %v1166, 1.442695
    %v1169 = vpow.pop %v1168
    %v1170 = vmul.f32 %v1167, 1.442695
    %v1171 = vpow.pop %v1170
    %v1172 = vsel %vm165, %v1169, 0.0
    %1173 = vadd.xlane.f32.xlu0 %v1172
    %v1174 = vpop.xlane.xlu0 %1173
    %v1175 = vsel %vm165, %v1171, 0.0
    %1176 = vadd.xlane.f32.xlu0 %v1175
    %v1177 = vpop.xlane.xlu0 %1176
    %v1178 = vrcp.pop %v1174
    %v1179 = vmul.f32 %v1174, %v1178
    %v1180 = vsub.f32 1.0, %v1179
    %v1181 = vmul.f32 %v1178, %v1180
    %v1182 = vadd.f32 %v1178, %v1181
    %vm1183 = vweird.f32 %v1174
    %vm1184 = vweird.f32 %v1178
    %vm1185 = vmor %vm1183, %vm1184
    %v1186 = vsel %vm1185, %v1178, %v1182
    %v1187 = vand.u32 2147483647, %v1174
    %vm1188 = vcmp.eq.f32.partialorder %v1187, 8.507059e+37
    %v1189 = vand.u32 %v1174, 2147483648
    %v1190 = vor.u32 1.1754944e-38, %v1189
    %v1191 = vsel %vm1188, %v1190, %v1186
    %v1192 = vmul.f32 %v1169, %v1191
    %v1193 = vrcp.pop %v1177
    %v1194 = vmul.f32 %v1177, %v1193
    %v1195 = vsub.f32 1.0, %v1194
    %v1196 = vmul.f32 %v1193, %v1195
    %v1197 = vadd.f32 %v1193, %v1196
    %vm1198 = vweird.f32 %v1177
    %vm1199 = vweird.f32 %v1193
    %vm1200 = vmor %vm1198, %vm1199
    %v1201 = vsel %vm1200, %v1193, %v1197
    %v1202 = vand.u32 2147483647, %v1177
    %vm1203 = vcmp.eq.f32.partialorder %v1202, 8.507059e+37
    %v1204 = vand.u32 %v1177, 2147483648
    %v1205 = vor.u32 1.1754944e-38, %v1204
    %v1206 = vsel %vm1203, %v1205, %v1201
    %v1207 = vmul.f32 %v1171, %v1206
    %1208 = vrot.lane.b32.xlu0 %v1099, 64
    %v1209 = vpop.permute.xlu0 %1208
    %v1212 = vsel %vm165, %v1192, 0
    %1214 = vmatpush.msra.mxu0 0.0
    %1215 = vmatpush.msra.mxu0 0.0
    %1216 = vmatpush.msra.mxu0 0.0
    %1217 = vmatpush.msra.mxu0 0.0
    %1218 = vmatpush.msra.mxu0 0.0
    %1219 = vmatpush.msra.mxu0 0.0
    %1220 = vmatpush.msra.mxu0 0.0
    %1221 = vmatpush.msra.mxu0 0.0
    %1222 = vmatpush.msra.mxu0 0.0
    %1223 = vmatpush.msra.mxu0 0.0
    %1224 = vmatpush.msra.mxu0 0.0
    %1225 = vmatpush.msra.mxu0 0.0
    %1226 = vmatpush.msra.mxu0 0.0
    %1227 = vmatpush.msra.mxu0 0.0
    %1228 = vmatpush.msra.mxu0 0.0
    %1229 = vmatpush.msra.mxu0 %v1209
    %1230 = vmatmul.f32.gmra.mxu0 %v1212
    %v1231 = vpop.f32.mrf.mxu0
    %v1232 = vadd.f32 0.0, %v1231
    %1233 = vdwg.mxu0
    %1234 = vrot.lane.b32.xlu0 %v1102, 64
    %v1235 = vpop.permute.xlu0 %1234
    %v1238 = vsel %vm165, %v1207, 0
    %1240 = vmatpush.msra.mxu0 0.0
    %1241 = vmatpush.msra.mxu0 0.0
    %1242 = vmatpush.msra.mxu0 0.0
    %1243 = vmatpush.msra.mxu0 0.0
    %1244 = vmatpush.msra.mxu0 0.0
    %1245 = vmatpush.msra.mxu0 0.0
    %1246 = vmatpush.msra.mxu0 0.0
    %1247 = vmatpush.msra.mxu0 0.0
    %1248 = vmatpush.msra.mxu0 0.0
    %1249 = vmatpush.msra.mxu0 0.0
    %1250 = vmatpush.msra.mxu0 0.0
    %1251 = vmatpush.msra.mxu0 0.0
    %1252 = vmatpush.msra.mxu0 0.0
    %1253 = vmatpush.msra.mxu0 0.0
    %1254 = vmatpush.msra.mxu0 0.0
    %1255 = vmatpush.msra.mxu0 %v1235
    %1256 = vmatmul.f32.gmra.mxu0 %v1238
    %v1257 = vpop.f32.mrf.mxu0
    %v1258 = vadd.f32 0.0, %v1257
    %1259 = vdwg.mxu0
    %1260 = vrot.lane.b32.xlu0 %v1099, 120
    %v1261 = vpop.permute.xlu0 %1260
    %1262 = vrot.lane.b32.xlu0 %v1099, 88
    %v1263 = vpop.permute.xlu0 %1262
    %v1264 = vsel %vm165, %v1261, 0
    %v1266 = vsel %vm165, %v1263, 0
    %1268 = vmatpush.xpose.msra.mxu0 0.0
    %1269 = vmatpush.xpose.msra.mxu0 0.0
    %1270 = vmatpush.xpose.msra.mxu0 0.0
    %1271 = vmatpush.xpose.msra.mxu0 0.0
    %1272 = vmatpush.xpose.msra.mxu0 0.0
    %1273 = vmatpush.xpose.msra.mxu0 0.0
    %1274 = vmatpush.xpose.msra.mxu0 0.0
    %1275 = vmatpush.xpose.msra.mxu0 0.0
    %1276 = vmatpush.xpose.msra.mxu0 0.0
    %1277 = vmatpush.xpose.msra.mxu0 0.0
    %1278 = vmatpush.xpose.msra.mxu0 0.0
    %1279 = vmatpush.xpose.msra.mxu0 0.0
    %1280 = vmatpush.xpose.msra.mxu0 0.0
    %1281 = vmatpush.xpose.msra.mxu0 0.0
    %1282 = vmatpush.xpose.msra.mxu0 0.0
    %1283 = vmatpush.xpose.msra.mxu0 %v1266
    %1284 = vmatmul.f32.gmra.mxu0 %v1264
    %v1285 = vpop.f32.mrf.mxu0
    %v1286 = vadd.f32 %v158, %v1285
    %1287 = vdwg.mxu0
    %1288 = vrot.lane.b32.xlu0 %v1102, 120
    %v1289 = vpop.permute.xlu0 %1288
    %1290 = vrot.lane.b32.xlu0 %v1102, 88
    %v1291 = vpop.permute.xlu0 %1290
    %v1292 = vsel %vm165, %v1289, 0
    %v1294 = vsel %vm165, %v1291, 0
    %1296 = vmatpush.xpose.msra.mxu0 0.0
    %1297 = vmatpush.xpose.msra.mxu0 0.0
    %1298 = vmatpush.xpose.msra.mxu0 0.0
    %1299 = vmatpush.xpose.msra.mxu0 0.0
    %1300 = vmatpush.xpose.msra.mxu0 0.0
    %1301 = vmatpush.xpose.msra.mxu0 0.0
    %1302 = vmatpush.xpose.msra.mxu0 0.0
    %1303 = vmatpush.xpose.msra.mxu0 0.0
    %1304 = vmatpush.xpose.msra.mxu0 0.0
    %1305 = vmatpush.xpose.msra.mxu0 0.0
    %1306 = vmatpush.xpose.msra.mxu0 0.0
    %1307 = vmatpush.xpose.msra.mxu0 0.0
    %1308 = vmatpush.xpose.msra.mxu0 0.0
    %1309 = vmatpush.xpose.msra.mxu0 0.0
    %1310 = vmatpush.xpose.msra.mxu0 0.0
    %1311 = vmatpush.xpose.msra.mxu0 %v1294
    %1312 = vmatmul.f32.gmra.mxu0 %v1292
    %v1313 = vpop.f32.mrf.mxu0
    %v1314 = vadd.f32 %v159, %v1313
    %1315 = vdwg.mxu0
    %v1316 = vmul.f32 %v1286, 0.17677669
    %v1317 = vmul.f32 %v1314, 0.17677669
    %v1318 = vsel %vm165, %v1316, -inf
    %1319 = vmax.xlane.f32.xlu0 %v1318
    %v1320 = vpop.xlane.xlu0 %1319
    %v1321 = vsel %vm165, %v1317, -inf
    %1322 = vmax.xlane.f32.xlu0 %v1321
    %v1323 = vpop.xlane.xlu0 %1322
    %v1324 = vsub.f32 %v1316, %v1320
    %v1325 = vsub.f32 %v1317, %v1323
    %v1326 = vmul.f32 %v1324, 1.442695
    %v1327 = vpow.pop %v1326
    %v1328 = vmul.f32 %v1325, 1.442695
    %v1329 = vpow.pop %v1328
    %v1330 = vsel %vm165, %v1327, 0.0
    %1331 = vadd.xlane.f32.xlu0 %v1330
    %v1332 = vpop.xlane.xlu0 %1331
    %v1333 = vsel %vm165, %v1329, 0.0
    %1334 = vadd.xlane.f32.xlu0 %v1333
    %v1335 = vpop.xlane.xlu0 %1334
    %v1336 = vrcp.pop %v1332
    %v1337 = vmul.f32 %v1332, %v1336
    %v1338 = vsub.f32 1.0, %v1337
    %v1339 = vmul.f32 %v1336, %v1338
    %v1340 = vadd.f32 %v1336, %v1339
    %vm1341 = vweird.f32 %v1332
    %vm1342 = vweird.f32 %v1336
    %vm1343 = vmor %vm1341, %vm1342
    %v1344 = vsel %vm1343, %v1336, %v1340
    %v1345 = vand.u32 2147483647, %v1332
    %vm1346 = vcmp.eq.f32.partialorder %v1345, 8.507059e+37
    %v1347 = vand.u32 %v1332, 2147483648
    %v1348 = vor.u32 1.1754944e-38, %v1347
    %v1349 = vsel %vm1346, %v1348, %v1344
    %v1350 = vmul.f32 %v1327, %v1349
    %v1351 = vrcp.pop %v1335
    %v1352 = vmul.f32 %v1335, %v1351
    %v1353 = vsub.f32 1.0, %v1352
    %v1354 = vmul.f32 %v1351, %v1353
    %v1355 = vadd.f32 %v1351, %v1354
    %vm1356 = vweird.f32 %v1335
    %vm1357 = vweird.f32 %v1351
    %vm1358 = vmor %vm1356, %vm1357
    %v1359 = vsel %vm1358, %v1351, %v1355
    %v1360 = vand.u32 2147483647, %v1335
    %vm1361 = vcmp.eq.f32.partialorder %v1360, 8.507059e+37
    %v1362 = vand.u32 %v1335, 2147483648
    %v1363 = vor.u32 1.1754944e-38, %v1362
    %v1364 = vsel %vm1361, %v1363, %v1359
    %v1365 = vmul.f32 %v1329, %v1364
    %1366 = vrot.lane.b32.xlu0 %v1099, 56
    %v1367 = vpop.permute.xlu0 %1366
    %v1370 = vsel %vm165, %v1350, 0
    %1372 = vmatpush.msra.mxu0 0.0
    %1373 = vmatpush.msra.mxu0 0.0
    %1374 = vmatpush.msra.mxu0 0.0
    %1375 = vmatpush.msra.mxu0 0.0
    %1376 = vmatpush.msra.mxu0 0.0
    %1377 = vmatpush.msra.mxu0 0.0
    %1378 = vmatpush.msra.mxu0 0.0
    %1379 = vmatpush.msra.mxu0 0.0
    %1380 = vmatpush.msra.mxu0 0.0
    %1381 = vmatpush.msra.mxu0 0.0
    %1382 = vmatpush.msra.mxu0 0.0
    %1383 = vmatpush.msra.mxu0 0.0
    %1384 = vmatpush.msra.mxu0 0.0
    %1385 = vmatpush.msra.mxu0 0.0
    %1386 = vmatpush.msra.mxu0 0.0
    %1387 = vmatpush.msra.mxu0 %v1367
    %1388 = vmatmul.f32.gmra.mxu0 %v1370
    %v1389 = vpop.f32.mrf.mxu0
    %v1390 = vadd.f32 0.0, %v1389
    %1391 = vdwg.mxu0
    %1392 = vrot.lane.b32.xlu0 %v1102, 56
    %v1393 = vpop.permute.xlu0 %1392
    %v1396 = vsel %vm165, %v1365, 0
    %1398 = vmatpush.msra.mxu0 0.0
    %1399 = vmatpush.msra.mxu0 0.0
    %1400 = vmatpush.msra.mxu0 0.0
    %1401 = vmatpush.msra.mxu0 0.0
    %1402 = vmatpush.msra.mxu0 0.0
    %1403 = vmatpush.msra.mxu0 0.0
    %1404 = vmatpush.msra.mxu0 0.0
    %1405 = vmatpush.msra.mxu0 0.0
    %1406 = vmatpush.msra.mxu0 0.0
    %1407 = vmatpush.msra.mxu0 0.0
    %1408 = vmatpush.msra.mxu0 0.0
    %1409 = vmatpush.msra.mxu0 0.0
    %1410 = vmatpush.msra.mxu0 0.0
    %1411 = vmatpush.msra.mxu0 0.0
    %1412 = vmatpush.msra.mxu0 0.0
    %1413 = vmatpush.msra.mxu0 %v1393
    %1414 = vmatmul.f32.gmra.mxu0 %v1396
    %v1415 = vpop.f32.mrf.mxu0
    %v1416 = vadd.f32 0.0, %v1415
    %1417 = vdwg.mxu0
    %1418 = vrot.lane.b32.xlu0 %v1099, 112
    %v1419 = vpop.permute.xlu0 %1418
    %1420 = vrot.lane.b32.xlu0 %v1099, 80
    %v1421 = vpop.permute.xlu0 %1420
    %v1422 = vsel %vm165, %v1419, 0
    %v1424 = vsel %vm165, %v1421, 0
    %1426 = vmatpush.xpose.msra.mxu0 0.0
    %1427 = vmatpush.xpose.msra.mxu0 0.0
    %1428 = vmatpush.xpose.msra.mxu0 0.0
    %1429 = vmatpush.xpose.msra.mxu0 0.0
    %1430 = vmatpush.xpose.msra.mxu0 0.0
    %1431 = vmatpush.xpose.msra.mxu0 0.0
    %1432 = vmatpush.xpose.msra.mxu0 0.0
    %1433 = vmatpush.xpose.msra.mxu0 0.0
    %1434 = vmatpush.xpose.msra.mxu0 0.0
    %1435 = vmatpush.xpose.msra.mxu0 0.0
    %1436 = vmatpush.xpose.msra.mxu0 0.0
    %1437 = vmatpush.xpose.msra.mxu0 0.0
    %1438 = vmatpush.xpose.msra.mxu0 0.0
    %1439 = vmatpush.xpose.msra.mxu0 0.0
    %1440 = vmatpush.xpose.msra.mxu0 0.0
    %1441 = vmatpush.xpose.msra.mxu0 %v1424
    %1442 = vmatmul.f32.gmra.mxu0 %v1422
    %v1443 = vpop.f32.mrf.mxu0
    %v1444 = vadd.f32 %v158, %v1443
    %1445 = vdwg.mxu0
    %1446 = vrot.lane.b32.xlu0 %v1102, 112
    %v1447 = vpop.permute.xlu0 %1446
    %1448 = vrot.lane.b32.xlu0 %v1102, 80
    %v1449 = vpop.permute.xlu0 %1448
    %v1450 = vsel %vm165, %v1447, 0
    %v1452 = vsel %vm165, %v1449, 0
    %1454 = vmatpush.xpose.msra.mxu0 0.0
    %1455 = vmatpush.xpose.msra.mxu0 0.0
    %1456 = vmatpush.xpose.msra.mxu0 0.0
    %1457 = vmatpush.xpose.msra.mxu0 0.0
    %1458 = vmatpush.xpose.msra.mxu0 0.0
    %1459 = vmatpush.xpose.msra.mxu0 0.0
    %1460 = vmatpush.xpose.msra.mxu0 0.0
    %1461 = vmatpush.xpose.msra.mxu0 0.0
    %1462 = vmatpush.xpose.msra.mxu0 0.0
    %1463 = vmatpush.xpose.msra.mxu0 0.0
    %1464 = vmatpush.xpose.msra.mxu0 0.0
    %1465 = vmatpush.xpose.msra.mxu0 0.0
    %1466 = vmatpush.xpose.msra.mxu0 0.0
    %1467 = vmatpush.xpose.msra.mxu0 0.0
    %1468 = vmatpush.xpose.msra.mxu0 0.0
    %1469 = vmatpush.xpose.msra.mxu0 %v1452
    %1470 = vmatmul.f32.gmra.mxu0 %v1450
    %v1471 = vpop.f32.mrf.mxu0
    %v1472 = vadd.f32 %v159, %v1471
    %1473 = vdwg.mxu0
    %v1474 = vmul.f32 %v1444, 0.17677669
    %v1475 = vmul.f32 %v1472, 0.17677669
    %v1476 = vsel %vm165, %v1474, -inf
    %1477 = vmax.xlane.f32.xlu0 %v1476
    %v1478 = vpop.xlane.xlu0 %1477
    %v1479 = vsel %vm165, %v1475, -inf
    %1480 = vmax.xlane.f32.xlu0 %v1479
    %v1481 = vpop.xlane.xlu0 %1480
    %v1482 = vsub.f32 %v1474, %v1478
    %v1483 = vsub.f32 %v1475, %v1481
    %v1484 = vmul.f32 %v1482, 1.442695
    %v1485 = vpow.pop %v1484
    %v1486 = vmul.f32 %v1483, 1.442695
    %v1487 = vpow.pop %v1486
    %v1488 = vsel %vm165, %v1485, 0.0
    %1489 = vadd.xlane.f32.xlu0 %v1488
    %v1490 = vpop.xlane.xlu0 %1489
    %v1491 = vsel %vm165, %v1487, 0.0
    %1492 = vadd.xlane.f32.xlu0 %v1491
    %v1493 = vpop.xlane.xlu0 %1492
    %v1494 = vrcp.pop %v1490
    %v1495 = vmul.f32 %v1490, %v1494
    %v1496 = vsub.f32 1.0, %v1495
    %v1497 = vmul.f32 %v1494, %v1496
    %v1498 = vadd.f32 %v1494, %v1497
    %vm1499 = vweird.f32 %v1490
    %vm1500 = vweird.f32 %v1494
    %vm1501 = vmor %vm1499, %vm1500
    %v1502 = vsel %vm1501, %v1494, %v1498
    %v1503 = vand.u32 2147483647, %v1490
    %vm1504 = vcmp.eq.f32.partialorder %v1503, 8.507059e+37
    %v1505 = vand.u32 %v1490, 2147483648
    %v1506 = vor.u32 1.1754944e-38, %v1505
    %v1507 = vsel %vm1504, %v1506, %v1502
    %v1508 = vmul.f32 %v1485, %v1507
    %v1509 = vrcp.pop %v1493
    %v1510 = vmul.f32 %v1493, %v1509
    %v1511 = vsub.f32 1.0, %v1510
    %v1512 = vmul.f32 %v1509, %v1511
    %v1513 = vadd.f32 %v1509, %v1512
    %vm1514 = vweird.f32 %v1493
    %vm1515 = vweird.f32 %v1509
    %vm1516 = vmor %vm1514, %vm1515
    %v1517 = vsel %vm1516, %v1509, %v1513
    %v1518 = vand.u32 2147483647, %v1493
    %vm1519 = vcmp.eq.f32.partialorder %v1518, 8.507059e+37
    %v1520 = vand.u32 %v1493, 2147483648
    %v1521 = vor.u32 1.1754944e-38, %v1520
    %v1522 = vsel %vm1519, %v1521, %v1517
    %v1523 = vmul.f32 %v1487, %v1522
    %1524 = vrot.lane.b32.xlu0 %v1099, 48
    %v1525 = vpop.permute.xlu0 %1524
    %v1528 = vsel %vm165, %v1508, 0
    %1530 = vmatpush.msra.mxu0 0.0
    %1531 = vmatpush.msra.mxu0 0.0
    %1532 = vmatpush.msra.mxu0 0.0
    %1533 = vmatpush.msra.mxu0 0.0
    %1534 = vmatpush.msra.mxu0 0.0
    %1535 = vmatpush.msra.mxu0 0.0
    %1536 = vmatpush.msra.mxu0 0.0
    %1537 = vmatpush.msra.mxu0 0.0
    %1538 = vmatpush.msra.mxu0 0.0
    %1539 = vmatpush.msra.mxu0 0.0
    %1540 = vmatpush.msra.mxu0 0.0
    %1541 = vmatpush.msra.mxu0 0.0
    %1542 = vmatpush.msra.mxu0 0.0
    %1543 = vmatpush.msra.mxu0 0.0
    %1544 = vmatpush.msra.mxu0 0.0
    %1545 = vmatpush.msra.mxu0 %v1525
    %1546 = vmatmul.f32.gmra.mxu0 %v1528
    %v1547 = vpop.f32.mrf.mxu0
    %v1548 = vadd.f32 0.0, %v1547
    %1549 = vdwg.mxu0
    %1550 = vrot.lane.b32.xlu0 %v1102, 48
    %v1551 = vpop.permute.xlu0 %1550
    %v1554 = vsel %vm165, %v1523, 0
    %1556 = vmatpush.msra.mxu0 0.0
    %1557 = vmatpush.msra.mxu0 0.0
    %1558 = vmatpush.msra.mxu0 0.0
    %1559 = vmatpush.msra.mxu0 0.0
    %1560 = vmatpush.msra.mxu0 0.0
    %1561 = vmatpush.msra.mxu0 0.0
    %1562 = vmatpush.msra.mxu0 0.0
    %1563 = vmatpush.msra.mxu0 0.0
    %1564 = vmatpush.msra.mxu0 0.0
    %1565 = vmatpush.msra.mxu0 0.0
    %1566 = vmatpush.msra.mxu0 0.0
    %1567 = vmatpush.msra.mxu0 0.0
    %1568 = vmatpush.msra.mxu0 0.0
    %1569 = vmatpush.msra.mxu0 0.0
    %1570 = vmatpush.msra.mxu0 0.0
    %1571 = vmatpush.msra.mxu0 %v1551
    %1572 = vmatmul.f32.gmra.mxu0 %v1554
    %v1573 = vpop.f32.mrf.mxu0
    %v1574 = vadd.f32 0.0, %v1573
    %1575 = vdwg.mxu0
    %1576 = vrot.lane.b32.xlu0 %v1099, 104
    %v1577 = vpop.permute.xlu0 %1576
    %1578 = vrot.lane.b32.xlu0 %v1099, 72
    %v1579 = vpop.permute.xlu0 %1578
    %v1580 = vsel %vm165, %v1577, 0
    %v1582 = vsel %vm165, %v1579, 0
    %1584 = vmatpush.xpose.msra.mxu0 0.0
    %1585 = vmatpush.xpose.msra.mxu0 0.0
    %1586 = vmatpush.xpose.msra.mxu0 0.0
    %1587 = vmatpush.xpose.msra.mxu0 0.0
    %1588 = vmatpush.xpose.msra.mxu0 0.0
    %1589 = vmatpush.xpose.msra.mxu0 0.0
    %1590 = vmatpush.xpose.msra.mxu0 0.0
    %1591 = vmatpush.xpose.msra.mxu0 0.0
    %1592 = vmatpush.xpose.msra.mxu0 0.0
    %1593 = vmatpush.xpose.msra.mxu0 0.0
    %1594 = vmatpush.xpose.msra.mxu0 0.0
    %1595 = vmatpush.xpose.msra.mxu0 0.0
    %1596 = vmatpush.xpose.msra.mxu0 0.0
    %1597 = vmatpush.xpose.msra.mxu0 0.0
    %1598 = vmatpush.xpose.msra.mxu0 0.0
    %1599 = vmatpush.xpose.msra.mxu0 %v1582
    %1600 = vmatmul.f32.gmra.mxu0 %v1580
    %v1601 = vpop.f32.mrf.mxu0
    %v1602 = vadd.f32 %v158, %v1601
    %1603 = vdwg.mxu0
    %1604 = vrot.lane.b32.xlu0 %v1102, 104
    %v1605 = vpop.permute.xlu0 %1604
    %1606 = vrot.lane.b32.xlu0 %v1102, 72
    %v1607 = vpop.permute.xlu0 %1606
    %v1608 = vsel %vm165, %v1605, 0
    %v1610 = vsel %vm165, %v1607, 0
    %1612 = vmatpush.xpose.msra.mxu0 0.0
    %1613 = vmatpush.xpose.msra.mxu0 0.0
    %1614 = vmatpush.xpose.msra.mxu0 0.0
    %1615 = vmatpush.xpose.msra.mxu0 0.0
    %1616 = vmatpush.xpose.msra.mxu0 0.0
    %1617 = vmatpush.xpose.msra.mxu0 0.0
    %1618 = vmatpush.xpose.msra.mxu0 0.0
    %1619 = vmatpush.xpose.msra.mxu0 0.0
    %1620 = vmatpush.xpose.msra.mxu0 0.0
    %1621 = vmatpush.xpose.msra.mxu0 0.0
    %1622 = vmatpush.xpose.msra.mxu0 0.0
    %1623 = vmatpush.xpose.msra.mxu0 0.0
    %1624 = vmatpush.xpose.msra.mxu0 0.0
    %1625 = vmatpush.xpose.msra.mxu0 0.0
    %1626 = vmatpush.xpose.msra.mxu0 0.0
    %1627 = vmatpush.xpose.msra.mxu0 %v1610
    %1628 = vmatmul.f32.gmra.mxu0 %v1608
    %v1629 = vpop.f32.mrf.mxu0
    %v1630 = vadd.f32 %v159, %v1629
    %1631 = vdwg.mxu0
    %v1632 = vmul.f32 %v1602, 0.17677669
    %v1633 = vmul.f32 %v1630, 0.17677669
    %v1634 = vsel %vm165, %v1632, -inf
    %1635 = vmax.xlane.f32.xlu0 %v1634
    %v1636 = vpop.xlane.xlu0 %1635
    %v1637 = vsel %vm165, %v1633, -inf
    %1638 = vmax.xlane.f32.xlu0 %v1637
    %v1639 = vpop.xlane.xlu0 %1638
    %v1640 = vsub.f32 %v1632, %v1636
    %v1641 = vsub.f32 %v1633, %v1639
    %v1642 = vmul.f32 %v1640, 1.442695
    %v1643 = vpow.pop %v1642
    %v1644 = vmul.f32 %v1641, 1.442695
    %v1645 = vpow.pop %v1644
    %v1646 = vsel %vm165, %v1643, 0.0
    %1647 = vadd.xlane.f32.xlu0 %v1646
    %v1648 = vpop.xlane.xlu0 %1647
    %v1649 = vsel %vm165, %v1645, 0.0
    %1650 = vadd.xlane.f32.xlu0 %v1649
    %v1651 = vpop.xlane.xlu0 %1650
    %v1652 = vrcp.pop %v1648
    %v1653 = vmul.f32 %v1648, %v1652
    %v1654 = vsub.f32 1.0, %v1653
    %v1655 = vmul.f32 %v1652, %v1654
    %v1656 = vadd.f32 %v1652, %v1655
    %vm1657 = vweird.f32 %v1648
    %vm1658 = vweird.f32 %v1652
    %vm1659 = vmor %vm1657, %vm1658
    %v1660 = vsel %vm1659, %v1652, %v1656
    %v1661 = vand.u32 2147483647, %v1648
    %vm1662 = vcmp.eq.f32.partialorder %v1661, 8.507059e+37
    %v1663 = vand.u32 %v1648, 2147483648
    %v1664 = vor.u32 1.1754944e-38, %v1663
    %v1665 = vsel %vm1662, %v1664, %v1660
    %v1666 = vmul.f32 %v1643, %v1665
    %v1667 = vrcp.pop %v1651
    %v1668 = vmul.f32 %v1651, %v1667
    %v1669 = vsub.f32 1.0, %v1668
    %v1670 = vmul.f32 %v1667, %v1669
    %v1671 = vadd.f32 %v1667, %v1670
    %vm1672 = vweird.f32 %v1651
    %vm1673 = vweird.f32 %v1667
    %vm1674 = vmor %vm1672, %vm1673
    %v1675 = vsel %vm1674, %v1667, %v1671
    %v1676 = vand.u32 2147483647, %v1651
    %vm1677 = vcmp.eq.f32.partialorder %v1676, 8.507059e+37
    %v1678 = vand.u32 %v1651, 2147483648
    %v1679 = vor.u32 1.1754944e-38, %v1678
    %v1680 = vsel %vm1677, %v1679, %v1675
    %v1681 = vmul.f32 %v1645, %v1680
    %1682 = vrot.lane.b32.xlu0 %v1099, 40
    %v1683 = vpop.permute.xlu0 %1682
    %v1686 = vsel %vm165, %v1666, 0
    %1688 = vmatpush.msra.mxu0 0.0
    %1689 = vmatpush.msra.mxu0 0.0
    %1690 = vmatpush.msra.mxu0 0.0
    %1691 = vmatpush.msra.mxu0 0.0
    %1692 = vmatpush.msra.mxu0 0.0
    %1693 = vmatpush.msra.mxu0 0.0
    %1694 = vmatpush.msra.mxu0 0.0
    %1695 = vmatpush.msra.mxu0 0.0
    %1696 = vmatpush.msra.mxu0 0.0
    %1697 = vmatpush.msra.mxu0 0.0
    %1698 = vmatpush.msra.mxu0 0.0
    %1699 = vmatpush.msra.mxu0 0.0
    %1700 = vmatpush.msra.mxu0 0.0
    %1701 = vmatpush.msra.mxu0 0.0
    %1702 = vmatpush.msra.mxu0 0.0
    %1703 = vmatpush.msra.mxu0 %v1683
    %1704 = vmatmul.f32.gmra.mxu0 %v1686
    %v1705 = vpop.f32.mrf.mxu0
    %v1706 = vadd.f32 0.0, %v1705
    %1707 = vdwg.mxu0
    %1708 = vrot.lane.b32.xlu0 %v1102, 40
    %v1709 = vpop.permute.xlu0 %1708
    %v1712 = vsel %vm165, %v1681, 0
    %1714 = vmatpush.msra.mxu0 0.0
    %1715 = vmatpush.msra.mxu0 0.0
    %1716 = vmatpush.msra.mxu0 0.0
    %1717 = vmatpush.msra.mxu0 0.0
    %1718 = vmatpush.msra.mxu0 0.0
    %1719 = vmatpush.msra.mxu0 0.0
    %1720 = vmatpush.msra.mxu0 0.0
    %1721 = vmatpush.msra.mxu0 0.0
    %1722 = vmatpush.msra.mxu0 0.0
    %1723 = vmatpush.msra.mxu0 0.0
    %1724 = vmatpush.msra.mxu0 0.0
    %1725 = vmatpush.msra.mxu0 0.0
    %1726 = vmatpush.msra.mxu0 0.0
    %1727 = vmatpush.msra.mxu0 0.0
    %1728 = vmatpush.msra.mxu0 0.0
    %1729 = vmatpush.msra.mxu0 %v1709
    %1730 = vmatmul.f32.gmra.mxu0 %v1712
    %v1731 = vpop.f32.mrf.mxu0
    %v1732 = vadd.f32 0.0, %v1731
    %1733 = vdwg.mxu0
    %1736 = vrot.lane.b32.xlu0 %v1390, 8
    %v1737 = vpop.permute.xlu0 %1736
    %1738 = vrot.lane.b32.xlu0 %v1416, 8
    %v1739 = vpop.permute.xlu0 %1738
    %1744 = vrot.lane.b32.xlu0 %v1548, 16
    %v1745 = vpop.permute.xlu0 %1744
    %1746 = vrot.lane.b32.xlu0 %v1574, 16
    %v1747 = vpop.permute.xlu0 %1746
    %1752 = vrot.lane.b32.xlu0 %v1706, 24
    %v1753 = vpop.permute.xlu0 %1752
    %1754 = vrot.lane.b32.xlu0 %v1732, 24
    %v1755 = vpop.permute.xlu0 %1754
    %v1758 = vsel %vm165, %v1232, %v1737
    %v1759 = vsel %vm165, %v1258, %v1739
    %v1760 = vsel %vm819, %v1758, %v1745
    %v1761 = vsel %vm819, %v1759, %v1747
    %v1762 = vsel %vm822, %v1760, %v1753
    %v1763 = vsel %vm822, %v1761, %v1755
    %s1764 = scalar_lea.vmem %s6, 32
    %v1765 = vld [vmem:[%s1764] sm:$0xff]
    %v1766 = vld [vmem:[%s1764 + $0x8] sm:$0xff]
    %v1767 = vld [vmem:[%s1764 + $0x10] sm:$0xff]
    %v1768 = vld [vmem:[%s1764 + $0x18] sm:$0xff]
    %s1769 = scalar_lea.vmem %s7, 1
    %v1770 = vld [vmem:[%s1769] sm:$0x1]
    %v1772 = vperm.slane %v1770, 0
    %v1775 = vsel %vm126, %v1762, 0
    %v1778 = vsel %vm126, %v1763, 0
    %1780 = vmatpush.msra.mxu0 0.0
    %1781 = vmatpush.msra.mxu0 0.0
    %1782 = vmatpush.msra.mxu0 0.0
    %1783 = vmatpush.msra.mxu0 0.0
    %1784 = vmatpush.msra.mxu0 0.0
    %1785 = vmatpush.msra.mxu0 0.0
    %1786 = vmatpush.msra.mxu0 0.0
    %1787 = vmatpush.msra.mxu0 0.0
    %1788 = vmatpush.msra.mxu0 0.0
    %1789 = vmatpush.msra.mxu0 0.0
    %1790 = vmatpush.msra.mxu0 0.0
    %1791 = vmatpush.msra.mxu0 0.0
    %1792 = vmatpush.msra.mxu0 %v1768
    %1793 = vmatpush.msra.mxu0 %v1767
    %1794 = vmatpush.msra.mxu0 %v1766
    %1795 = vmatpush.msra.mxu0 %v1765
    %1796 = vmatmul.f32.gmra.mxu0 %v1775
    %v1797 = vpop.f32.mrf.mxu0
    %v1798 = vadd.f32 %v1772, %v1797
    %1799 = vmatmul.f32.gmra.mxu0 %v1778
    %v1800 = vpop.f32.mrf.mxu0
    %v1801 = vadd.f32 %v1772, %v1800
    %1802 = vdwg.mxu0
    %v1803 = vadd.f32 %v1798, %v1063
    %v1804 = vadd.f32 %v1801, %v1064
    %s1805 = scalar_lea.vmem %s8, 1
    %v1806 = vld [vmem:[%s1805] sm:$0x1]
    %s1807 = scalar_lea.vmem %s9, 1
    %v1808 = vld [vmem:[%s1807] sm:$0x1]
    %v1809 = vsel %vm126, %v1803, 0.0
    %1810 = vadd.xlane.f32.xlu0 %v1809
    %v1811 = vpop.xlane.xlu0 %1810
    %v1812 = vsel %vm126, %v1804, 0.0
    %1813 = vadd.xlane.f32.xlu0 %v1812
    %v1814 = vpop.xlane.xlu0 %1813
    %v1815 = vmul.f32 %v1811, %v878
    %v1816 = vmul.f32 %v1814, %v878
    %v1817 = vsub.f32 %v1803, %v1815
    %v1818 = vsub.f32 %v1804, %v1816
    %v1819 = vmul.f32 %v1817, %v1817
    %v1820 = vmul.f32 %v1818, %v1818
    %v1821 = vsel %vm126, %v1819, 0.0
    %1822 = vadd.xlane.f32.xlu0 %v1821
    %v1823 = vpop.xlane.xlu0 %1822
    %v1824 = vsel %vm126, %v1820, 0.0
    %1825 = vadd.xlane.f32.xlu0 %v1824
    %v1826 = vpop.xlane.xlu0 %1825
    %v1827 = vmul.f32 %v1823, %v878
    %v1828 = vmul.f32 %v1826, %v878
    %v1829 = vadd.f32 %v1827, 1e-06
    %v1830 = vadd.f32 %v1828, 1e-06
    %v1831 = vrsqrt.pop %v1829
    %v1832 = vmul.f32 %v1831, %v1829
    %v1833 = vmul.f32 %v1832, %v1831
    %v1834 = vmul.f32 0.5, %v1833
    %v1835 = vsub.f32 1.5, %v1834
    %v1836 = vmul.f32 %v1831, %v1835
    %vm1837 = vweird.f32 %v1829
    %vm1838 = vweird.f32 %v1831
    %vm1839 = vmor %vm1837, %vm1838
    %v1840 = vsel %vm1839, %v1831, %v1836
    %v1841 = vrsqrt.pop %v1830
    %v1842 = vmul.f32 %v1841, %v1830
    %v1843 = vmul.f32 %v1842, %v1841
    %v1844 = vmul.f32 0.5, %v1843
    %v1845 = vsub.f32 1.5, %v1844
    %v1846 = vmul.f32 %v1841, %v1845
    %vm1847 = vweird.f32 %v1830
    %vm1848 = vweird.f32 %v1841
    %vm1849 = vmor %vm1847, %vm1848
    %v1850 = vsel %vm1849, %v1841, %v1846
    %v1851 = vmul.f32 %v1817, %v1840
    %v1852 = vmul.f32 %v1818, %v1850
    %v1854 = vperm.slane %v1806, 0
    %v1856 = vmul.f32 %v1851, %v1854
    %v1857 = vmul.f32 %v1852, %v1854
    %v1859 = vperm.slane %v1808, 0
    %v1861 = vadd.f32 %v1856, %v1859
    %v1862 = vadd.f32 %v1857, %v1859
    %s1863 = scalar_lea.vmem %s10, 32
    %v1864 = vld [vmem:[%s1863] sm:$0xff]
    %v1865 = vld [vmem:[%s1863 + $0x8] sm:$0xff]
    %v1866 = vld [vmem:[%s1863 + $0x10] sm:$0xff]
    %v1867 = vld [vmem:[%s1863 + $0x18] sm:$0xff]
    %s1868 = scalar_lea.vmem %s11, 1
    %v1869 = vld [vmem:[%s1868] sm:$0x1]
    %v1871 = vperm.slane %v1869, 0
    %v1874 = vsel %vm126, %v1861, 0
    %v1877 = vsel %vm126, %v1862, 0
    %1879 = vmatpush.msra.mxu0 0.0
    %1880 = vmatpush.msra.mxu0 0.0
    %1881 = vmatpush.msra.mxu0 0.0
    %1882 = vmatpush.msra.mxu0 0.0
    %1883 = vmatpush.msra.mxu0 0.0
    %1884 = vmatpush.msra.mxu0 0.0
    %1885 = vmatpush.msra.mxu0 0.0
    %1886 = vmatpush.msra.mxu0 0.0
    %1887 = vmatpush.msra.mxu0 0.0
    %1888 = vmatpush.msra.mxu0 0.0
    %1889 = vmatpush.msra.mxu0 0.0
    %1890 = vmatpush.msra.mxu0 0.0
    %1891 = vmatpush.msra.mxu0 %v1867
    %1892 = vmatpush.msra.mxu0 %v1866
    %1893 = vmatpush.msra.mxu0 %v1865
    %1894 = vmatpush.msra.mxu0 %v1864
    %1895 = vmatmul.f32.gmra.mxu0 %v1874
    %v1896 = vpop.f32.mrf.mxu0
    %v1897 = vadd.f32 %v1871, %v1896
    %1898 = vmatmul.f32.gmra.mxu0 %v1877
    %v1899 = vpop.f32.mrf.mxu0
    %v1900 = vadd.f32 %v1871, %v1899
    %1901 = vdwg.mxu0
    %v1902 = vmax.f32 %v1897, 0.0
    %v1903 = vmax.f32 %v1900, 0.0
    %s1904 = scalar_lea.vmem %s12, 64
    %v1905 = vld [vmem:[%s1904] sm:$0xff]
    %v1906 = vld [vmem:[%s1904 + $0x8] sm:$0xff]
    %v1907 = vld [vmem:[%s1904 + $0x10] sm:$0xff]
    %v1908 = vld [vmem:[%s1904 + $0x18] sm:$0xff]
    %v1909 = vld [vmem:[%s1904 + $0x20] sm:$0xff]
    %v1910 = vld [vmem:[%s1904 + $0x28] sm:$0xff]
    %v1911 = vld [vmem:[%s1904 + $0x30] sm:$0xff]
    %v1912 = vld [vmem:[%s1904 + $0x38] sm:$0xff]
    %s1913 = scalar_lea.vmem %s13, 1
    %v1914 = vld [vmem:[%s1913] sm:$0x1]
    %v1916 = vperm.slane %v1914, 0
    %v1919 = vsel %vm86, %v1902, 0
    %v1922 = vsel %vm86, %v1903, 0
    %1924 = vmatpush.msra.mxu0 0.0
    %1925 = vmatpush.msra.mxu0 0.0
    %1926 = vmatpush.msra.mxu0 0.0
    %1927 = vmatpush.msra.mxu0 0.0
    %1928 = vmatpush.msra.mxu0 0.0
    %1929 = vmatpush.msra.mxu0 0.0
    %1930 = vmatpush.msra.mxu0 0.0
    %1931 = vmatpush.msra.mxu0 0.0
    %1932 = vmatpush.msra.mxu0 %v1912
    %1933 = vmatpush.msra.mxu0 %v1911
    %1934 = vmatpush.msra.mxu0 %v1910
    %1935 = vmatpush.msra.mxu0 %v1909
    %1936 = vmatpush.msra.mxu0 %v1908
    %1937 = vmatpush.msra.mxu0 %v1907
    %1938 = vmatpush.msra.mxu0 %v1906
    %1939 = vmatpush.msra.mxu0 %v1905
    %1940 = vmatmul.f32.gmra.mxu0 %v1919
    %v1941 = vpop.f32.mrf.mxu0
    %v1942 = vadd.f32 %v1916, %v1941
    %1943 = vmatmul.f32.gmra.mxu0 %v1922
    %v1944 = vpop.f32.mrf.mxu0
    %v1945 = vadd.f32 %v1916, %v1944
    %1946 = vdwg.mxu0
    %v1947 = vadd.f32 %v1942, %v1861
    %v1948 = vadd.f32 %v1945, %v1862
    %s1949 = scalar_lea.vmem %s14, 1
    %v1950 = vld [vmem:[%s1949] sm:$0x1]
    %s1951 = scalar_lea.vmem %s15, 1
    %v1952 = vld [vmem:[%s1951] sm:$0x1]
    %v1953 = vsel %vm126, %v1947, 0.0
    %1954 = vadd.xlane.f32.xlu0 %v1953
    %v1955 = vpop.xlane.xlu0 %1954
    %v1956 = vsel %vm126, %v1948, 0.0
    %1957 = vadd.xlane.f32.xlu0 %v1956
    %v1958 = vpop.xlane.xlu0 %1957
    %v1959 = vmul.f32 %v1955, %v878
    %v1960 = vmul.f32 %v1958, %v878
    %v1961 = vsub.f32 %v1947, %v1959
    %v1962 = vsub.f32 %v1948, %v1960
    %v1963 = vmul.f32 %v1961, %v1961
    %v1964 = vmul.f32 %v1962, %v1962
    %v1965 = vsel %vm126, %v1963, 0.0
    %1966 = vadd.xlane.f32.xlu0 %v1965
    %v1967 = vpop.xlane.xlu0 %1966
    %v1968 = vsel %vm126, %v1964, 0.0
    %1969 = vadd.xlane.f32.xlu0 %v1968
    %v1970 = vpop.xlane.xlu0 %1969
    %v1971 = vmul.f32 %v1967, %v878
    %v1972 = vmul.f32 %v1970, %v878
    %v1973 = vadd.f32 %v1971, 1e-06
    %v1974 = vadd.f32 %v1972, 1e-06
    %v1975 = vrsqrt.pop %v1973
    %v1976 = vmul.f32 %v1975, %v1973
    %v1977 = vmul.f32 %v1976, %v1975
    %v1978 = vmul.f32 0.5, %v1977
    %v1979 = vsub.f32 1.5, %v1978
    %v1980 = vmul.f32 %v1975, %v1979
    %vm1981 = vweird.f32 %v1973
    %vm1982 = vweird.f32 %v1975
    %vm1983 = vmor %vm1981, %vm1982
    %v1984 = vsel %vm1983, %v1975, %v1980
    %v1985 = vrsqrt.pop %v1974
    %v1986 = vmul.f32 %v1985, %v1974
    %v1987 = vmul.f32 %v1986, %v1985
    %v1988 = vmul.f32 0.5, %v1987
    %v1989 = vsub.f32 1.5, %v1988
    %v1990 = vmul.f32 %v1985, %v1989
    %vm1991 = vweird.f32 %v1974
    %vm1992 = vweird.f32 %v1985
    %vm1993 = vmor %vm1991, %vm1992
    %v1994 = vsel %vm1993, %v1985, %v1990
    %v1995 = vmul.f32 %v1961, %v1984
    %v1996 = vmul.f32 %v1962, %v1994
    %v1998 = vperm.slane %v1950, 0
    %v2000 = vmul.f32 %v1995, %v1998
    %v2001 = vmul.f32 %v1996, %v1998
    %v2003 = vperm.slane %v1952, 0
    %v2005 = vadd.f32 %v2000, %v2003
    %v2006 = vadd.f32 %v2001, %v2003
    %v2007 = vld [vmem:[%s16] sm:$0xff]
    %v2008 = vld [vmem:[%s16 + $0x8] sm:$0xff]
    %v2009 = vld [vmem:[%s16 + $0x10] sm:$0xff]
    %v2010 = vld [vmem:[%s16 + $0x18] sm:$0xff]
    %v2011 = vld [vmem:[%s17] sm:$0x1]
    %v2013 = vperm.slane %v2011, 0
    %v2017 = vrot.slane %v2006, 7
    %vm2018 = vcmask 1041409
    %v2019 = vsel %vm2018, %v2017, %v2005
    %v2020 = vsel %vm126, %v2019, 0
    %2022 = vmatpush.msra.mxu0 0.0
    %2023 = vmatpush.msra.mxu0 0.0
    %2024 = vmatpush.msra.mxu0 0.0
    %2025 = vmatpush.msra.mxu0 0.0
    %2026 = vmatpush.msra.mxu0 0.0
    %2027 = vmatpush.msra.mxu0 0.0
    %2028 = vmatpush.msra.mxu0 0.0
    %2029 = vmatpush.msra.mxu0 0.0
    %2030 = vmatpush.msra.mxu0 0.0
    %2031 = vmatpush.msra.mxu0 0.0
    %2032 = vmatpush.msra.mxu0 0.0
    %2033 = vmatpush.msra.mxu0 0.0
    %2034 = vmatpush.msra.mxu0 %v2010
    %2035 = vmatpush.msra.mxu0 %v2009
    %2036 = vmatpush.msra.mxu0 %v2008
    %2037 = vmatpush.msra.mxu0 %v2007
    %2038 = vmatmul.f32.gmra.mxu0 %v2020
    %v2039 = vpop.f32.mrf.mxu0
    %v2040 = vadd.f32 %v2013, %v2039
    %2041 = vdwg.mxu0
    %vm2042 = vcmask 9216
    %2043 = vst.msk [vmem:[#allocation2] sm:$0x3] %vm2042, %v2040
    // Predicated region
    $region74: #{encoder_forward.1} parent=1 // pred_check
      _
    $region75: #{encoder_forward.1} parent=1 // pred_check_branch
      %2045 = sbr.rel (0) target = $region77
    $region76: #{encoder_forward.1} parent=1 // pred_region
      %2047 = vsyncadd [#allocation3], 0
      %s2049 = sshll.u32 [#allocation2], 4
      %s2050 = int_to_ptr.vmem [resolvable:$true] %s2049
      %s2051 = sshll.u32 %s18, 4
      %s2052 = int_to_ptr.hbm [resolvable:$true] %s2051
      %2054 = dma.vmem_to_hbm [thread:$0]  %s2050, 32, %s2052, [#allocation3]
    $region77: #{encoder_forward.1} parent=1 // pred_fallthru
      _
    // Predicated region
    $region78: #{encoder_forward.1} parent=1 // pred_check
      _
    $region79: #{encoder_forward.1} parent=1 // pred_check_branch
      %2056 = sbr.rel (0) target = $region81
    $region80: #{encoder_forward.1} parent=1 // pred_region
      %2058 = dma.done [#allocation3], 32
    $region81: #{encoder_forward.1} parent=1 // pred_fallthru
      _
    %2059 = vsyncpa [#allocation3], 1

</llo_original>
